<compile_context>
chip_gen: v6e
topology: v6e:2x2x1
jax: 0.10.0
libtpu: 0.0.40
codegen_flags: <defaults>
</compile_context>

<pallas_src>
import jax
import jax.numpy as jnp
from jax.experimental import pallas as pl
from jax.experimental.pallas import tpu as pltpu

# ----------------------------- model shapes -----------------------------
SPLIT = 16                      # categorical modality width (decoder.split)
D_CONT = 16                     # continuous modality width
D_IN = SPLIT + D_CONT           # encoder input width
HID = 32                        # hidden width (encoder & decoder)
Z = 8                           # num_latent_units
D_OUT = SPLIT + 2 * D_CONT      # cat logits + (cont loc, cont log_scale) = 48

# augmented widths (extra "ones/bias" column carried through the network)
D_INA = D_IN + 1
HIDA = HID + 1
ZA = Z + 1

OUT_W = 128                     # lane-dense output slab width (>= D_OUT + 3*ZA)

# Dot-operand dtype.  Keep f32 at these toy sizes; for large batches on
# v6e/v7x set to jnp.bfloat16 (accumulation stays f32 via
# preferred_element_type; exp/ReLU/reparameterization stay f32).
DOT_DTYPE = jnp.float32


# ------------------------------- kernel ---------------------------------
def _bimodal_vae_kernel(x_ref, eps_ref, w1_ref, w2l_ref, w2v_ref, w3_ref,
                        w4_ref, out_ref):
    x = x_ref[...].astype(DOT_DTYPE)                     # (TB, D_INA), last col = 1

    # encoder layer 1 (bias folded into last row of w1; ReLU(1)=1 keeps the
    # bias column alive for the next layer)
    h1 = jnp.dot(x, w1_ref[...].astype(DOT_DTYPE),
                 preferred_element_type=jnp.float32)
    h1 = jnp.maximum(h1, 0.0).astype(DOT_DTYPE)          # (TB, HIDA)

    # encoder layer 2: z_loc / z_log_var come from their own column blocks,
    # so no lane-axis slicing of a matmul result is needed.
    z_loc = jnp.dot(h1, w2l_ref[...].astype(DOT_DTYPE),
                    preferred_element_type=jnp.float32)  # (TB, ZA), last col = 1
    z_log_var = jnp.dot(h1, w2v_ref[...].astype(DOT_DTYPE),
                        preferred_element_type=jnp.float32)  # last col = 0

    # VAE.encode: z_scale = exp(0.5 * z_log_var)  (EUP slot, keep in f32)
    z_scale = jnp.exp(0.5 * z_log_var)                   # last col = 1
    # reparameterize: z = loc + scale * eps (eps aug column is 0 -> z col = 1)
    z = z_loc + z_scale * eps_ref[...]                   # (TB, ZA)

    # decoder (bias folded the same way)
    h2 = jnp.dot(z.astype(DOT_DTYPE), w3_ref[...].astype(DOT_DTYPE),
                 preferred_element_type=jnp.float32)
    h2 = jnp.maximum(h2, 0.0).astype(DOT_DTYPE)          # (TB, HIDA)
    dec = jnp.dot(h2, w4_ref[...].astype(DOT_DTYPE),
                  preferred_element_type=jnp.float32)    # (TB, D_OUT)

    # Single lane-dense output slab (TB, 128):
    #   [dec(48) | z_aug(9) | z_loc_aug(9) | z_scale_aug(9) | zeros(53)]
    # One unmasked full-block store -> one lane-dense write-back DMA.
    tb = dec.shape[0]
    pad = jnp.zeros((tb, OUT_W - (D_OUT + 3 * ZA)), jnp.float32)
    out_ref[...] = jnp.concatenate([dec, z, z_loc, z_scale, pad], axis=-1)


# --------------------------- parameter packing ---------------------------
def _pack_params(params):
    """Fold biases into weights (augmented-row / ones-column trick) and split
    the encoder head into z_loc / z_log_var column blocks."""
    w1, b1, w2, b2, w3, b3, w4, b4 = params
    f32 = jnp.float32
    b1, b2, b3, b4 = (b.reshape(-1) for b in (b1, b2, b3, b4))

    w1p = jnp.zeros((D_INA, HIDA), f32)
    w1p = w1p.at[:D_IN, :HID].set(w1).at[D_IN, :HID].set(b1).at[D_IN, HID].set(1.0)

    w2l = jnp.zeros((HIDA, ZA), f32)      # -> z_loc (aug col produces constant 1)
    w2l = w2l.at[:HID, :Z].set(w2[:, :Z]).at[HID, :Z].set(b2[:Z]).at[HID, Z].set(1.0)

    w2v = jnp.zeros((HIDA, ZA), f32)      # -> z_log_var (aug col stays 0)
    w2v = w2v.at[:HID, :Z].set(w2[:, Z:]).at[HID, :Z].set(b2[Z:])

    w3p = jnp.zeros((ZA, HIDA), f32)
    w3p = w3p.at[:Z, :HID].set(w3).at[Z, :HID].set(b3).at[Z, HID].set(1.0)

    w4p = jnp.zeros((HIDA, D_OUT), f32)
    w4p = w4p.at[:HID, :].set(w4).at[HID, :].set(b4)

    return w1p, w2l, w2v, w3p, w4p


# ------------------------------- wrapper ---------------------------------
def bimodal_vae_forward(x, eps, params, *, tb=256):
    """Fused BimodalVAE forward.

    Returns (x_cat_logits, x_cont_loc, x_cont_log_scale, z, z_loc, z_scale).
    """
    batch = x.shape[0]
    w1p, w2l, w2v, w3p, w4p = _pack_params(params)

    # Augment: x gets a ones column (drives the folded biases), eps a zeros
    # column (so the carried "1" column of z stays exactly 1).
    x_aug = jnp.concatenate([x, jnp.ones((batch, 1), jnp.float32)], axis=1)
    eps_aug = jnp.concatenate([eps, jnp.zeros((batch, 1), jnp.float32)], axis=1)

    # Pad the batch to a multiple of the row tile.
    n_blk = pl.cdiv(batch, tb)
    bp = n_blk * tb
    if bp != batch:
        x_aug = jnp.pad(x_aug, ((0, bp - batch), (0, 0)))
        eps_aug = jnp.pad(eps_aug, ((0, bp - batch), (0, 0)))

    def row_spec(shape):
        return pl.BlockSpec(shape, lambda i: (i, 0))

    def resident_spec(shape):                       # weights stay in VMEM
        return pl.BlockSpec(shape, lambda i: (0, 0))

    out = pl.pallas_call(
        _bimodal_vae_kernel,
        out_shape=jax.ShapeDtypeStruct((bp, OUT_W), jnp.float32),
        grid=(n_blk,),
        in_specs=[
            row_spec((tb, D_INA)),        # x (augmented)
            row_spec((tb, ZA)),           # eps (augmented)
            resident_spec((D_INA, HIDA)), # encoder layer 1 (+bias row)
            resident_spec((HIDA, ZA)),    # encoder head -> z_loc
            resident_spec((HIDA, ZA)),    # encoder head -> z_log_var
            resident_spec((ZA, HIDA)),    # decoder layer 1 (+bias row)
            resident_spec((HIDA, D_OUT)), # decoder layer 2 (+bias row)
        ],
        out_specs=row_spec((tb, OUT_W)),
        compiler_params=pltpu.CompilerParams(
            # batch axis is embarrassingly parallel -> shards across the two
            # v7x TensorCores (no-op on v5e/v6e).  VMEM footprint per step
            # (tb x 128-lane slabs, double-buffered, + resident weights) is
            # well under the 32 MiB default scoped limit on all generations.
            dimension_semantics=("parallel",)),
    )(x_aug, eps_aug, w1p, w2l, w2v, w3p, w4p)

    out = out[:batch]
    # Lane-dense slab layout: [dec(48) | z(9) | z_loc(9) | z_scale(9) | pad].
    x_cat_logits = out[:, :SPLIT]
    x_cont_loc = out[:, SPLIT:SPLIT + D_CONT]
    x_cont_log_scale = out[:, SPLIT + D_CONT:D_OUT]
    z = out[:, D_OUT:D_OUT + Z]
    z_loc = out[:, D_OUT + ZA:D_OUT + ZA + Z]
    z_scale = out[:, D_OUT + 2 * ZA:D_OUT + 2 * ZA + Z]
    return x_cat_logits, x_cont_loc, x_cont_log_scale, z, z_loc, z_scale


# -------------------------------- init -----------------------------------
def _init_params(key):
    """Deterministic synthetic parameters (PyTorch-style Linear shapes)."""
    ks = jax.random.split(key, 8)

    def linear(kw, kb, fan_in, fan_out):
        w = jax.random.normal(kw, (fan_in, fan_out), jnp.float32) / jnp.sqrt(fan_in)
        b = 0.1 * jax.random.normal(kb, (1, fan_out), jnp.float32)
        return w, b

    w1, b1 = linear(ks[0], ks[1], D_IN, HID)      # encoder layer 1
    w2, b2 = linear(ks[2], ks[3], HID, 2 * Z)     # encoder head [z_loc | z_log_var]
    w3, b3 = linear(ks[4], ks[5], Z, HID)         # decoder layer 1
    w4, b4 = linear(ks[6], ks[7], HID, D_OUT)     # decoder head (bimodal params)
    return (w1, b1, w2, b2, w3, b3, w4, b4)


if __name__ == "__main__":
    key = jax.random.PRNGKey(0)
    k_x, k_eps, k_p = jax.random.split(key, 3)

    B = 512                     # 2 grid steps of 256-row tiles
    x = jax.random.normal(k_x, (B, D_IN), jnp.float32)
    # Reparameterization noise (Normal.rsample), sampled outside the kernel.
    eps = jax.random.normal(k_eps, (B, Z), jnp.float32)
    params = _init_params(k_p)

    outs = bimodal_vae_forward(x, eps, params, tb=256)
    outs = jax.block_until_ready(outs)

    # Pure-JAX reference (original, un-folded parameters).
    w1, b1, w2, b2, w3, b3, w4, b4 = params
    h1 = jnp.maximum(x @ w1 + b1, 0.0)
    enc = h1 @ w2 + b2
    z_loc_r, z_log_var_r = enc[:, :Z], enc[:, Z:]
    z_scale_r = jnp.exp(0.5 * z_log_var_r)
    z_r = z_loc_r + z_scale_r * eps
    h2 = jnp.maximum(z_r @ w3 + b3, 0.0)
    dec = h2 @ w4 + b4
    refs = (dec[:, :SPLIT], dec[:, SPLIT:SPLIT + D_CONT], dec[:, SPLIT + D_CONT:],
            z_r, z_loc_r, z_scale_r)

    for got, want in zip(outs, refs):
        assert got.shape == want.shape, (got.shape, want.shape)
        assert jnp.allclose(got, want, atol=1e-4, rtol=1e-4), \
            float(jnp.max(jnp.abs(got - want)))

    print("KERNEL_OK")
</pallas_src>

<mosaic_0001>
module attributes {stable_mosaic.version = 11 : i64} {
  func.func @_bimodal_vae_kernel(%arg0: i32, %arg1: memref<256x33xf32, #tpu.memory_space<vmem>>, %arg2: memref<256x9xf32, #tpu.memory_space<vmem>>, %arg3: memref<33x33xf32, #tpu.memory_space<vmem>>, %arg4: memref<33x9xf32, #tpu.memory_space<vmem>>, %arg5: memref<33x9xf32, #tpu.memory_space<vmem>>, %arg6: memref<9x33xf32, #tpu.memory_space<vmem>>, %arg7: memref<33x48xf32, #tpu.memory_space<vmem>>, %arg8: memref<256x128xf32, #tpu.memory_space<vmem>>) attributes {dimension_semantics = [#tpu.dimension_semantics<parallel>], iteration_bounds = array<i64: 2>, scalar_prefetch = 0 : i64, scratch_operands = 0 : i64, tpu.core_type = #tpu.core_type<tc>, window_params = [{transform_indices = @transform_0, window_bounds = array<i64: 256, 33>}, {transform_indices = @transform_1, window_bounds = array<i64: 256, 9>}, {pipeline_mode = #tpu.pipeline_mode<synchronous>, transform_indices = @transform_2, window_bounds = array<i64: 33, 33>}, {pipeline_mode = #tpu.pipeline_mode<synchronous>, transform_indices = @transform_3, window_bounds = array<i64: 33, 9>}, {pipeline_mode = #tpu.pipeline_mode<synchronous>, transform_indices = @transform_4, window_bounds = array<i64: 33, 9>}, {pipeline_mode = #tpu.pipeline_mode<synchronous>, transform_indices = @transform_5, window_bounds = array<i64: 9, 33>}, {pipeline_mode = #tpu.pipeline_mode<synchronous>, transform_indices = @transform_6, window_bounds = array<i64: 33, 48>}, {transform_indices = @transform_7, window_bounds = array<i64: 256, 128>}]} {
    %c0 = arith.constant 0 : index
    %c0_0 = arith.constant 0 : index
    %0 = vector.load %arg1[%c0, %c0_0] : memref<256x33xf32, #tpu.memory_space<vmem>>, vector<256x33xf32>
    %c0_1 = arith.constant 0 : index
    %c0_2 = arith.constant 0 : index
    %1 = vector.load %arg3[%c0_1, %c0_2] : memref<33x33xf32, #tpu.memory_space<vmem>>, vector<33x33xf32>
    %cst = arith.constant dense<0.000000e+00> : vector<256x33xf32>
    %2 = tpu.matmul %0, %1, %cst {dimension_numbers = #tpu.dot_dimension_numbers<[1], [0], [0], [1], [0, 0, 1, 1], [], []>} : vector<256x33xf32>, vector<33x33xf32>, vector<256x33xf32> -> vector<256x33xf32>
    %cst_3 = arith.constant 0.000000e+00 : f32
    %3 = vector.broadcast %cst_3 : f32 to vector<256x33xf32>
    %4 = arith.maximumf %2, %3 : vector<256x33xf32>
    %c0_4 = arith.constant 0 : index
    %c0_5 = arith.constant 0 : index
    %5 = vector.load %arg4[%c0_4, %c0_5] : memref<33x9xf32, #tpu.memory_space<vmem>>, vector<33x9xf32>
    %cst_6 = arith.constant dense<0.000000e+00> : vector<256x9xf32>
    %6 = tpu.matmul %4, %5, %cst_6 {dimension_numbers = #tpu.dot_dimension_numbers<[1], [0], [0], [1], [0, 0, 1, 1], [], []>} : vector<256x33xf32>, vector<33x9xf32>, vector<256x9xf32> -> vector<256x9xf32>
    %c0_7 = arith.constant 0 : index
    %c0_8 = arith.constant 0 : index
    %7 = vector.load %arg5[%c0_7, %c0_8] : memref<33x9xf32, #tpu.memory_space<vmem>>, vector<33x9xf32>
    %cst_9 = arith.constant dense<0.000000e+00> : vector<256x9xf32>
    %8 = tpu.matmul %4, %7, %cst_9 {dimension_numbers = #tpu.dot_dimension_numbers<[1], [0], [0], [1], [0, 0, 1, 1], [], []>} : vector<256x33xf32>, vector<33x9xf32>, vector<256x9xf32> -> vector<256x9xf32>
    %cst_10 = arith.constant 5.000000e-01 : f32
    %9 = vector.broadcast %cst_10 : f32 to vector<256x9xf32>
    %10 = arith.mulf %9, %8 : vector<256x9xf32>
    %11 = math.exp %10 : vector<256x9xf32>
    %c0_11 = arith.constant 0 : index
    %c0_12 = arith.constant 0 : index
    %12 = vector.load %arg2[%c0_11, %c0_12] : memref<256x9xf32, #tpu.memory_space<vmem>>, vector<256x9xf32>
    %13 = arith.mulf %11, %12 : vector<256x9xf32>
    %14 = arith.addf %6, %13 : vector<256x9xf32>
    %c0_13 = arith.constant 0 : index
    %c0_14 = arith.constant 0 : index
    %15 = vector.load %arg6[%c0_13, %c0_14] : memref<9x33xf32, #tpu.memory_space<vmem>>, vector<9x33xf32>
    %cst_15 = arith.constant dense<0.000000e+00> : vector<256x33xf32>
    %16 = tpu.matmul %14, %15, %cst_15 {dimension_numbers = #tpu.dot_dimension_numbers<[1], [0], [0], [1], [0, 0, 1, 1], [], []>} : vector<256x9xf32>, vector<9x33xf32>, vector<256x33xf32> -> vector<256x33xf32>
    %cst_16 = arith.constant 0.000000e+00 : f32
    %17 = vector.broadcast %cst_16 : f32 to vector<256x33xf32>
    %18 = arith.maximumf %16, %17 : vector<256x33xf32>
    %c0_17 = arith.constant 0 : index
    %c0_18 = arith.constant 0 : index
    %19 = vector.load %arg7[%c0_17, %c0_18] : memref<33x48xf32, #tpu.memory_space<vmem>>, vector<33x48xf32>
    %cst_19 = arith.constant dense<0.000000e+00> : vector<256x48xf32>
    %20 = tpu.matmul %18, %19, %cst_19 {dimension_numbers = #tpu.dot_dimension_numbers<[1], [0], [0], [1], [0, 0, 1, 1], [], []>} : vector<256x33xf32>, vector<33x48xf32>, vector<256x48xf32> -> vector<256x48xf32>
    %cst_20 = arith.constant 0.000000e+00 : f32
    %21 = vector.broadcast %cst_20 : f32 to vector<256x53xf32>
    %22 = tpu.concatenate %20, %14, %6, %11, %21 in 1 : vector<256x48xf32>, vector<256x9xf32>, vector<256x9xf32>, vector<256x9xf32>, vector<256x53xf32> -> vector<256x128xf32>
    %c0_21 = arith.constant 0 : index
    %c0_22 = arith.constant 0 : index
    %23 = vector.load %arg8[%c0_21, %c0_22] : memref<256x128xf32, #tpu.memory_space<vmem>>, vector<256x128xf32>
    tpu.vector_store %arg8[%c0_21, %c0_22], %22 {strides = array<i32>} : memref<256x128xf32, #tpu.memory_space<vmem>>, vector<256x128xf32>,
    return
  }
  func.func @transform_0(%arg0: i32) -> (i32, i32) {
    %c0_i32 = arith.constant 0 : i32
    %c0_i32_0 = arith.constant 0 : i32
    return %arg0, %c0_i32 : i32, i32
  }
  func.func @transform_1(%arg0: i32) -> (i32, i32) {
    %c0_i32 = arith.constant 0 : i32
    %c0_i32_0 = arith.constant 0 : i32
    return %arg0, %c0_i32 : i32, i32
  }
  func.func @transform_2(%arg0: i32) -> (i32, i32) {
    %c0_i32 = arith.constant 0 : i32
    %c0_i32_0 = arith.constant 0 : i32
    %c0_i32_1 = arith.constant 0 : i32
    return %c0_i32, %c0_i32_0 : i32, i32
  }
  func.func @transform_3(%arg0: i32) -> (i32, i32) {
    %c0_i32 = arith.constant 0 : i32
    %c0_i32_0 = arith.constant 0 : i32
    %c0_i32_1 = arith.constant 0 : i32
    return %c0_i32, %c0_i32_0 : i32, i32
  }
  func.func @transform_4(%arg0: i32) -> (i32, i32) {
    %c0_i32 = arith.constant 0 : i32
    %c0_i32_0 = arith.constant 0 : i32
    %c0_i32_1 = arith.constant 0 : i32
    return %c0_i32, %c0_i32_0 : i32, i32
  }
  func.func @transform_5(%arg0: i32) -> (i32, i32) {
    %c0_i32 = arith.constant 0 : i32
    %c0_i32_0 = arith.constant 0 : i32
    %c0_i32_1 = arith.constant 0 : i32
    return %c0_i32, %c0_i32_0 : i32, i32
  }
  func.func @transform_6(%arg0: i32) -> (i32, i32) {
    %c0_i32 = arith.constant 0 : i32
    %c0_i32_0 = arith.constant 0 : i32
    %c0_i32_1 = arith.constant 0 : i32
    return %c0_i32, %c0_i32_0 : i32, i32
  }
  func.func @transform_7(%arg0: i32) -> (i32, i32) {
    %c0_i32 = arith.constant 0 : i32
    %c0_i32_0 = arith.constant 0 : i32
    return %arg0, %c0_i32 : i32, i32
  }
}

</mosaic_0001>

<llo_original>
// kernel: tpu_custom_call.1
$region0: #{tpu_custom_call.1}
  #allocation0 [shape = 'u32[]', space=smem, size = 0x4, offset = 0x4, fixed_abs, tag = 'smem constant byte address 0x4 - core index']
  #allocation1 [shape = 'u32[144,128]{1,0:T(1,128)}', space=vmem, size = 0x12000, scoped, tag = 'internal scratch']
  %s0 = inlined_call_operand.vmem [shape: f32[512,33], index: 0, kind: input, shape index: {}]
  %s1 = inlined_call_operand.vmem [shape: f32[512,9], index: 1, kind: input, shape index: {}]
  %s2 = inlined_call_operand.vmem [shape: f32[33,33], index: 2, kind: input, shape index: {}]
  %s3 = inlined_call_operand.vmem [shape: f32[33,9], index: 3, kind: input, shape index: {}]
  %s4 = inlined_call_operand.vmem [shape: f32[33,9], index: 4, kind: input, shape index: {}]
  %s5 = inlined_call_operand.vmem [shape: f32[9,33], index: 5, kind: input, shape index: {}]
  %s6 = inlined_call_operand.vmem [shape: f32[33,48], index: 6, kind: input, shape index: {}]
  %s7 = inlined_call_operand.hbm [shape: f32[512,128], index: 7, kind: output, shape index: {}]
  %s8 = sld [smem:[#allocation0]]
  $region61: #{tpu_custom_call.1} parent=0
    _
  %s10 = ssub.s32 1, %s8
  %s11 = scalar_select 0, %s10, %s8
  $region1: #{tpu_custom_call.1} parent=0
    #allocation2 [shape = 'u8[262144]{0}', space=vmem, size = 0x40000, scoped, tag = 'output window, operand 0']
    #allocation3 [shape = 's32[2]{0}', space=sflag, size = 0x8, scoped, tag = 'scoped memory for tpu_custom_call.1']
    %12 = vsyncpa [#allocation3], 0
    %s13 = scalar_lea.sflag [#allocation3], 1
    %14 = vsyncpa %s13, 0
    loop: start=0, step=1, limit=4
    $region2: #{tpu_custom_call.1} parent=1 // loop_pre_header
      _
    $region3: #{tpu_custom_call.1} parent=1 // loop_header
      %s16 = sphi 0, %s20
      %p17 = scmp.ge.s32.totalorder %s16, 4
      %s26 = sphi 0, %s28
      %s29 = sphi 0, %s26
      %s30 = sphi 0, %s29
      %s46 = sphi 0, %s30
      %s52 = sphi 0, %s54
      %s55 = sphi 0, %s52
      %s56 = sphi 0, %s55
      %s72 = sphi 0, %s56
      %s76 = sphi 0, %s76
      %s78 = sphi 0, %s76
      %s79 = sphi 0, %s78
      %s93 = sphi 0, %s79
      %s97 = sphi 0, %s97
      %s99 = sphi 0, %s97
      %s100 = sphi 0, %s99
      %s114 = sphi 0, %s100
      %s118 = sphi 0, %s118
      %s120 = sphi 0, %s118
      %s121 = sphi 0, %s120
      %s135 = sphi 0, %s121
      %s139 = sphi 0, %s139
      %s141 = sphi 0, %s139
      %s142 = sphi 0, %s141
      %s156 = sphi 0, %s142
      %s160 = sphi 0, %s160
      %s162 = sphi 0, %s160
      %s163 = sphi 0, %s162
      %s177 = sphi 0, %s163
      %s183 = sphi 0, %s185
      %s186 = sphi 0, %s183
      %s187 = sphi 0, %s186
      %s203 = sphi 0, %s187
    $region4: #{tpu_custom_call.1} parent=1 // loop_header_branch
      %19 = sbr.rel (%p17) target = $region8
    $region5: #{tpu_custom_call.1} parent=1 // loop_body
      %s21 = ssub.s32 %s16, 1
      %s22 = ssub.s32 %s16, 2
      %s23 = sadd.s32 %s16, 1
      %s24 = ssub.s32 %s16, %s23
      %p25 = scmp.eq.s32.totalorder %s24, 0
      %s27 = sadd.s32 %s26, 1
      %s28 = scalar_select %p25, %s26, %s27
      %p31 = pneg %p25
      %p32 = scmp.eq.s32.totalorder %s16, 1
      %p33 = por %p31, %p32
      %p34 = scmp.ne.s32.totalorder %s26, %s29
      %p35 = scmp.eq.s32.totalorder %s16, 0
      %p36 = por %p34, %p35
      %p37 = scmp.ne.s32.totalorder %s26, %s29
      %p38 = scmp.eq.s32.totalorder %s21, 1
      %p39 = por %p37, %p38
      %p40 = scmp.ne.s32.totalorder %s29, %s30
      %p41 = scmp.eq.s32.totalorder %s21, 0
      %p42 = por %p40, %p41
      %p43 = scmp.ne.s32.totalorder %s29, %s30
      %p44 = scmp.eq.s32.totalorder %s22, 1
      %p45 = por %p43, %p44
      %p47 = scmp.ne.s32.totalorder %s30, %s46
      %p48 = scmp.eq.s32.totalorder %s22, 0
      %p49 = por %p47, %p48
      %s50 = ssub.s32 %s16, %s23
      %p51 = scmp.eq.s32.totalorder %s50, 0
      %s53 = sadd.s32 %s52, 1
      %s54 = scalar_select %p51, %s52, %s53
      %p57 = pneg %p51
      %p58 = scmp.eq.s32.totalorder %s16, 1
      %p59 = por %p57, %p58
      %p60 = scmp.ne.s32.totalorder %s52, %s55
      %p61 = scmp.eq.s32.totalorder %s16, 0
      %p62 = por %p60, %p61
      %p63 = scmp.ne.s32.totalorder %s52, %s55
      %p64 = scmp.eq.s32.totalorder %s21, 1
      %p65 = por %p63, %p64
      %p66 = scmp.ne.s32.totalorder %s55, %s56
      %p67 = scmp.eq.s32.totalorder %s21, 0
      %p68 = por %p66, %p67
      %p69 = scmp.ne.s32.totalorder %s55, %s56
      %p70 = scmp.eq.s32.totalorder %s22, 1
      %p71 = por %p69, %p70
      %p73 = scmp.ne.s32.totalorder %s56, %s72
      %p74 = scmp.eq.s32.totalorder %s22, 0
      %p75 = por %p73, %p74
      %s77 = sadd.s32 %s76, 1
      %p80 = scmp.eq.s32.totalorder %s16, 1
      %p81 = scmp.ne.s32.totalorder %s76, %s78
      %p82 = scmp.eq.s32.totalorder %s16, 0
      %p83 = por %p81, %p82
      %p84 = scmp.ne.s32.totalorder %s76, %s78
      %p85 = scmp.eq.s32.totalorder %s21, 1
      %p86 = por %p84, %p85
      %p87 = scmp.ne.s32.totalorder %s78, %s79
      %p88 = scmp.eq.s32.totalorder %s21, 0
      %p89 = por %p87, %p88
      %p90 = scmp.ne.s32.totalorder %s78, %s79
      %p91 = scmp.eq.s32.totalorder %s22, 1
      %p92 = por %p90, %p91
      %p94 = scmp.ne.s32.totalorder %s79, %s93
      %p95 = scmp.eq.s32.totalorder %s22, 0
      %p96 = por %p94, %p95
      %s98 = sadd.s32 %s97, 1
      %p101 = scmp.eq.s32.totalorder %s16, 1
      %p102 = scmp.ne.s32.totalorder %s97, %s99
      %p103 = scmp.eq.s32.totalorder %s16, 0
      %p104 = por %p102, %p103
      %p105 = scmp.ne.s32.totalorder %s97, %s99
      %p106 = scmp.eq.s32.totalorder %s21, 1
      %p107 = por %p105, %p106
      %p108 = scmp.ne.s32.totalorder %s99, %s100
      %p109 = scmp.eq.s32.totalorder %s21, 0
      %p110 = por %p108, %p109
      %p111 = scmp.ne.s32.totalorder %s99, %s100
      %p112 = scmp.eq.s32.totalorder %s22, 1
      %p113 = por %p111, %p112
      %p115 = scmp.ne.s32.totalorder %s100, %s114
      %p116 = scmp.eq.s32.totalorder %s22, 0
      %p117 = por %p115, %p116
      %s119 = sadd.s32 %s118, 1
      %p122 = scmp.eq.s32.totalorder %s16, 1
      %p123 = scmp.ne.s32.totalorder %s118, %s120
      %p124 = scmp.eq.s32.totalorder %s16, 0
      %p125 = por %p123, %p124
      %p126 = scmp.ne.s32.totalorder %s118, %s120
      %p127 = scmp.eq.s32.totalorder %s21, 1
      %p128 = por %p126, %p127
      %p129 = scmp.ne.s32.totalorder %s120, %s121
      %p130 = scmp.eq.s32.totalorder %s21, 0
      %p131 = por %p129, %p130
      %p132 = scmp.ne.s32.totalorder %s120, %s121
      %p133 = scmp.eq.s32.totalorder %s22, 1
      %p134 = por %p132, %p133
      %p136 = scmp.ne.s32.totalorder %s121, %s135
      %p137 = scmp.eq.s32.totalorder %s22, 0
      %p138 = por %p136, %p137
      %s140 = sadd.s32 %s139, 1
      %p143 = scmp.eq.s32.totalorder %s16, 1
      %p144 = scmp.ne.s32.totalorder %s139, %s141
      %p145 = scmp.eq.s32.totalorder %s16, 0
      %p146 = por %p144, %p145
      %p147 = scmp.ne.s32.totalorder %s139, %s141
      %p148 = scmp.eq.s32.totalorder %s21, 1
      %p149 = por %p147, %p148
      %p150 = scmp.ne.s32.totalorder %s141, %s142
      %p151 = scmp.eq.s32.totalorder %s21, 0
      %p152 = por %p150, %p151
      %p153 = scmp.ne.s32.totalorder %s141, %s142
      %p154 = scmp.eq.s32.totalorder %s22, 1
      %p155 = por %p153, %p154
      %p157 = scmp.ne.s32.totalorder %s142, %s156
      %p158 = scmp.eq.s32.totalorder %s22, 0
      %p159 = por %p157, %p158
      %s161 = sadd.s32 %s160, 1
      %p164 = scmp.eq.s32.totalorder %s16, 1
      %p165 = scmp.ne.s32.totalorder %s160, %s162
      %p166 = scmp.eq.s32.totalorder %s16, 0
      %p167 = por %p165, %p166
      %p168 = scmp.ne.s32.totalorder %s160, %s162
      %p169 = scmp.eq.s32.totalorder %s21, 1
      %p170 = por %p168, %p169
      %p171 = scmp.ne.s32.totalorder %s162, %s163
      %p172 = scmp.eq.s32.totalorder %s21, 0
      %p173 = por %p171, %p172
      %p174 = scmp.ne.s32.totalorder %s162, %s163
      %p175 = scmp.eq.s32.totalorder %s22, 1
      %p176 = por %p174, %p175
      %p178 = scmp.ne.s32.totalorder %s163, %s177
      %p179 = scmp.eq.s32.totalorder %s22, 0
      %p180 = por %p178, %p179
      %s181 = ssub.s32 %s16, %s23
      %p182 = scmp.eq.s32.totalorder %s181, 0
      %s184 = sadd.s32 %s183, 1
      %s185 = scalar_select %p182, %s183, %s184
      %p188 = pneg %p182
      %p189 = scmp.eq.s32.totalorder %s16, 1
      %p190 = por %p188, %p189
      %p191 = scmp.ne.s32.totalorder %s183, %s186
      %p192 = scmp.eq.s32.totalorder %s16, 0
      %p193 = por %p191, %p192
      %p194 = scmp.ne.s32.totalorder %s183, %s186
      %p195 = scmp.eq.s32.totalorder %s21, 1
      %p196 = por %p194, %p195
      %p197 = scmp.ne.s32.totalorder %s186, %s187
      %p198 = scmp.eq.s32.totalorder %s21, 0
      %p199 = por %p197, %p198
      %p200 = scmp.ne.s32.totalorder %s186, %s187
      %p201 = scmp.eq.s32.totalorder %s22, 1
      %p202 = por %p200, %p201
      %p204 = scmp.ne.s32.totalorder %s187, %s203
      %p205 = scmp.eq.s32.totalorder %s22, 0
      %p206 = por %p204, %p205
      %p207 = scmp.le.s32.totalorder 1, %s16
      %p208 = scmp.lt.s32.totalorder %s16, 3
      %p209 = pnand %p207, %p208
      %p210 = pneg %p209
      // Predicated region
      $region9: #{tpu_custom_call.1} parent=5 // pred_check
        _
      $region10: #{tpu_custom_call.1} parent=5 // pred_check_branch
        %212 = sbr.rel (%p209) target = $region12
      $region11: #{tpu_custom_call.1} parent=5 // pred_region
        %s213 = ssub.s32 %s16, 1
        // Predicated region
        $region13: #{tpu_custom_call.1} parent=11 // pred_check
          %p214 = pneg %p89
        $region14: #{tpu_custom_call.1} parent=11 // pred_check_branch
          %216 = sbr.rel (%p214) target = $region16
        $region15: #{tpu_custom_call.1} parent=11 // pred_region
          _
        $region16: #{tpu_custom_call.1} parent=11 // pred_fallthru
          _
        // Predicated region
        $region17: #{tpu_custom_call.1} parent=11 // pred_check
          %p217 = pneg %p110
        $region18: #{tpu_custom_call.1} parent=11 // pred_check_branch
          %219 = sbr.rel (%p217) target = $region20
        $region19: #{tpu_custom_call.1} parent=11 // pred_region
          _
        $region20: #{tpu_custom_call.1} parent=11 // pred_fallthru
          _
        // Predicated region
        $region21: #{tpu_custom_call.1} parent=11 // pred_check
          %p220 = pneg %p131
        $region22: #{tpu_custom_call.1} parent=11 // pred_check_branch
          %222 = sbr.rel (%p220) target = $region24
        $region23: #{tpu_custom_call.1} parent=11 // pred_region
          _
        $region24: #{tpu_custom_call.1} parent=11 // pred_fallthru
          _
        // Predicated region
        $region25: #{tpu_custom_call.1} parent=11 // pred_check
          %p223 = pneg %p152
        $region26: #{tpu_custom_call.1} parent=11 // pred_check_branch
          %225 = sbr.rel (%p223) target = $region28
        $region27: #{tpu_custom_call.1} parent=11 // pred_region
          _
        $region28: #{tpu_custom_call.1} parent=11 // pred_fallthru
          _
        // Predicated region
        $region29: #{tpu_custom_call.1} parent=11 // pred_check
          %p226 = pneg %p173
        $region30: #{tpu_custom_call.1} parent=11 // pred_check_branch
          %228 = sbr.rel (%p226) target = $region32
        $region31: #{tpu_custom_call.1} parent=11 // pred_region
          _
        $region32: #{tpu_custom_call.1} parent=11 // pred_fallthru
          _
      $region12: #{tpu_custom_call.1} parent=5 // pred_fallthru
        _
      %p229 = scmp.lt.s32.totalorder %s16, 2
      // Predicated region
      $region33: #{tpu_custom_call.1} parent=5 // pred_check
        %p230 = pneg %p229
      $region34: #{tpu_custom_call.1} parent=5 // pred_check_branch
        %232 = sbr.rel (%p230) target = $region36
      $region35: #{tpu_custom_call.1} parent=5 // pred_region
        // Predicated region
        $region37: #{tpu_custom_call.1} parent=35 // pred_check
          %p233 = pneg %p36
        $region38: #{tpu_custom_call.1} parent=35 // pred_check_branch
          %235 = sbr.rel (%p233) target = $region40
        $region39: #{tpu_custom_call.1} parent=35 // pred_region
          %s236 = smul.u32 32, %s16
          %p237 = scmp.lt.s32.totalorder %s236, 63
          %s238 = scalar_select %p237, %s236, 63
          %s239 = smul.addr %s238, 8
          %s240 = scalar_lea.vmem %s0, %s239
          %s241 = smul.u32 32, %s16
        $region40: #{tpu_custom_call.1} parent=35 // pred_fallthru
          _
        // Predicated region
        $region41: #{tpu_custom_call.1} parent=35 // pred_check
          %p242 = pneg %p62
        $region42: #{tpu_custom_call.1} parent=35 // pred_check_branch
          %244 = sbr.rel (%p242) target = $region44
        $region43: #{tpu_custom_call.1} parent=35 // pred_region
          %s245 = smul.u32 32, %s16
          %p246 = scmp.lt.s32.totalorder %s245, 63
          %s247 = scalar_select %p246, %s245, 63
          %s248 = smul.addr %s247, 8
          %s249 = scalar_lea.vmem %s1, %s248
          %s250 = smul.u32 32, %s16
        $region44: #{tpu_custom_call.1} parent=35 // pred_fallthru
          _
      $region36: #{tpu_custom_call.1} parent=5 // pred_fallthru
        _
      %p251 = scmp.le.s32.totalorder 1, %s16
      %p252 = scmp.lt.s32.totalorder %s16, 3
      %p253 = pnand %p251, %p252
      %p254 = pneg %p253
      // Predicated region
      $region45: #{tpu_custom_call.1} parent=5 // pred_check
        _
      $region46: #{tpu_custom_call.1} parent=5 // pred_check_branch
        %256 = sbr.rel (%p253) target = $region48
      $region47: #{tpu_custom_call.1} parent=5 // pred_region
        %s257 = ssub.s32 %s16, 1
        %s258 = smul.u32 32, %s21
        %p259 = scmp.lt.s32.totalorder %s258, 63
        %s260 = scalar_select %p259, %s258, 63
        %s261 = smul.addr %s260, 8
        %s262 = scalar_lea.vmem %s0, %s261
        %p263 = pneg %p42
        %p264 = pneg %p39
        %s265 = smul.u32 32, %s21
        %p266 = scmp.lt.s32.totalorder %s265, 63
        %s267 = scalar_select %p266, %s265, 63
        %s268 = smul.addr %s267, 8
        %s269 = scalar_lea.vmem %s1, %s268
        %p270 = pneg %p68
        %p271 = pneg %p65
        %p272 = pneg %p89
        %p273 = pneg %p86
        %p274 = pneg %p110
        %p275 = pneg %p107
        %p276 = pneg %p131
        %p277 = pneg %p128
        %p278 = pneg %p152
        %p279 = pneg %p149
        %p280 = pneg %p173
        %p281 = pneg %p170
        %p282 = pneg %p199
        %p283 = pneg %p196
        %s284 = sand.u32 %s186, 1
        %s285 = scalar_lea.sflag [#allocation3], %s284
        %s286 = sand.u32 %s186, 1
        %s287 = smul.addr %s286, 256
        %s288 = scalar_lea.vmem [#allocation2], %s287
        %s289 = smul.u32 32, %s21
        %p290 = scmp.lt.s32.totalorder %s289, 63
        %s291 = scalar_select %p290, %s289, 63
        %s292 = smul.addr %s291, 8
        %s293 = scalar_lea.vmem %s0, %s292
        %s294 = smul.u32 32, %s21
        %s295 = smul.u32 32, %s21
        %p296 = scmp.lt.s32.totalorder %s295, 63
        %s297 = scalar_select %p296, %s295, 63
        %s298 = smul.addr %s297, 8
        %s299 = scalar_lea.vmem %s1, %s298
        %s300 = smul.u32 32, %s21
        %s301 = smul.u32 32, %s21
        %v302 = vld [vmem:[%s293] sm:$0xff]
        %v303 = vld [vmem:[%s293 + $0x8] sm:$0xff]
        %v304 = vld [vmem:[%s293 + $0x10] sm:$0xff]
        %v305 = vld [vmem:[%s293 + $0x18] sm:$0xff]
        %v306 = vld [vmem:[%s293 + $0x20] sm:$0xff]
        %v307 = vld [vmem:[%s293 + $0x28] sm:$0xff]
        %v308 = vld [vmem:[%s293 + $0x30] sm:$0xff]
        %v309 = vld [vmem:[%s293 + $0x38] sm:$0xff]
        %v310 = vld [vmem:[%s293 + $0x40] sm:$0xff]
        %v311 = vld [vmem:[%s293 + $0x48] sm:$0xff]
        %v312 = vld [vmem:[%s293 + $0x50] sm:$0xff]
        %v313 = vld [vmem:[%s293 + $0x58] sm:$0xff]
        %v314 = vld [vmem:[%s293 + $0x60] sm:$0xff]
        %v315 = vld [vmem:[%s293 + $0x68] sm:$0xff]
        %v316 = vld [vmem:[%s293 + $0x70] sm:$0xff]
        %v317 = vld [vmem:[%s293 + $0x78] sm:$0xff]
        %v318 = vld [vmem:[%s293 + $0x80] sm:$0xff]
        %v319 = vld [vmem:[%s293 + $0x88] sm:$0xff]
        %v320 = vld [vmem:[%s293 + $0x90] sm:$0xff]
        %v321 = vld [vmem:[%s293 + $0x98] sm:$0xff]
        %v322 = vld [vmem:[%s293 + $0xa0] sm:$0xff]
        %v323 = vld [vmem:[%s293 + $0xa8] sm:$0xff]
        %v324 = vld [vmem:[%s293 + $0xb0] sm:$0xff]
        %v325 = vld [vmem:[%s293 + $0xb8] sm:$0xff]
        %v326 = vld [vmem:[%s293 + $0xc0] sm:$0xff]
        %v327 = vld [vmem:[%s293 + $0xc8] sm:$0xff]
        %v328 = vld [vmem:[%s293 + $0xd0] sm:$0xff]
        %v329 = vld [vmem:[%s293 + $0xd8] sm:$0xff]
        %v330 = vld [vmem:[%s293 + $0xe0] sm:$0xff]
        %v331 = vld [vmem:[%s293 + $0xe8] sm:$0xff]
        %v332 = vld [vmem:[%s293 + $0xf0] sm:$0xff]
        %v333 = vld [vmem:[%s293 + $0xf8] sm:$0xff]
        %v334 = vld [vmem:[%s2] sm:$0xff]
        %v335 = vld [vmem:[%s2 + $0x8] sm:$0xff]
        %v336 = vld [vmem:[%s2 + $0x10] sm:$0xff]
        %v337 = vld [vmem:[%s2 + $0x18] sm:$0xff]
        %v338 = vld [vmem:[%s2 + $0x20] sm:$0x1]
        %vm339 = vcmask 269312
        %v341 = vsel %vm339, %v302, 0
        %v344 = vsel %vm339, %v303, 0
        %v347 = vsel %vm339, %v304, 0
        %v350 = vsel %vm339, %v305, 0
        %v353 = vsel %vm339, %v306, 0
        %v356 = vsel %vm339, %v307, 0
        %v359 = vsel %vm339, %v308, 0
        %v362 = vsel %vm339, %v309, 0
        %v365 = vsel %vm339, %v310, 0
        %v368 = vsel %vm339, %v311, 0
        %v371 = vsel %vm339, %v312, 0
        %v374 = vsel %vm339, %v313, 0
        %v377 = vsel %vm339, %v314, 0
        %v380 = vsel %vm339, %v315, 0
        %v383 = vsel %vm339, %v316, 0
        %v386 = vsel %vm339, %v317, 0
        %v389 = vsel %vm339, %v318, 0
        %v392 = vsel %vm339, %v319, 0
        %v395 = vsel %vm339, %v320, 0
        %v398 = vsel %vm339, %v321, 0
        %v401 = vsel %vm339, %v322, 0
        %v404 = vsel %vm339, %v323, 0
        %v407 = vsel %vm339, %v324, 0
        %v410 = vsel %vm339, %v325, 0
        %v413 = vsel %vm339, %v326, 0
        %v416 = vsel %vm339, %v327, 0
        %v419 = vsel %vm339, %v328, 0
        %v422 = vsel %vm339, %v329, 0
        %v425 = vsel %vm339, %v330, 0
        %v428 = vsel %vm339, %v331, 0
        %v431 = vsel %vm339, %v332, 0
        %v434 = vsel %vm339, %v333, 0
        %vm436 = vcmask 1040384
        %v438 = vsel %vm436, %v338, 0
        %440 = vmatprep.subr.mxu0 0.0
        %441 = vmatpush1.msra.mxu0 0.0
        %442 = vmatprep.subr.mxu0 0.0
        %443 = vmatpush1.msra.mxu0 0.0
        %444 = vmatprep.subr.mxu0 0.0
        %445 = vmatpush1.msra.mxu0 0.0
        %446 = vmatprep.subr.mxu0 0.0
        %447 = vmatpush1.msra.mxu0 0.0
        %448 = vmatprep.subr.mxu0 0.0
        %449 = vmatpush1.msra.mxu0 0.0
        %450 = vmatprep.subr.mxu0 0.0
        %451 = vmatpush1.msra.mxu0 0.0
        %452 = vmatprep.subr.mxu0 0.0
        %453 = vmatpush1.msra.mxu0 0.0
        %454 = vmatprep.subr.mxu0 0.0
        %455 = vmatpush1.msra.mxu0 0.0
        %456 = vmatprep.subr.mxu0 0.0
        %457 = vmatpush1.msra.mxu0 0.0
        %458 = vmatprep.subr.mxu0 0.0
        %459 = vmatpush1.msra.mxu0 0.0
        %460 = vmatprep.subr.mxu0 0.0
        %461 = vmatpush1.msra.mxu0 0.0
        %462 = vmatprep.subr.mxu0 0.0
        %463 = vmatpush1.msra.mxu0 %v438
        %464 = vmatprep.subr.mxu0 0.0
        %465 = vmatpush1.msra.mxu0 %v337
        %466 = vmatprep.subr.mxu0 0.0
        %467 = vmatpush1.msra.mxu0 %v336
        %468 = vmatprep.subr.mxu0 0.0
        %469 = vmatpush1.msra.mxu0 %v335
        %470 = vmatprep.subr.mxu0 0.0
        %471 = vmatpush1.msra.mxu0 %v334
        %472 = vmatprep.subr.mxu0 0.0
        %473 = vmatpush2.msra.mxu0 0.0
        %474 = vmatprep.subr.mxu0 0.0
        %475 = vmatpush2.msra.mxu0 0.0
        %476 = vmatprep.subr.mxu0 0.0
        %477 = vmatpush2.msra.mxu0 0.0
        %478 = vmatprep.subr.mxu0 0.0
        %479 = vmatpush2.msra.mxu0 0.0
        %480 = vmatprep.subr.mxu0 0.0
        %481 = vmatpush2.msra.mxu0 0.0
        %482 = vmatprep.subr.mxu0 0.0
        %483 = vmatpush2.msra.mxu0 0.0
        %484 = vmatprep.subr.mxu0 0.0
        %485 = vmatpush2.msra.mxu0 0.0
        %486 = vmatprep.subr.mxu0 0.0
        %487 = vmatpush2.msra.mxu0 0.0
        %488 = vmatprep.subr.mxu0 0.0
        %489 = vmatpush2.msra.mxu0 0.0
        %490 = vmatprep.subr.mxu0 0.0
        %491 = vmatpush2.msra.mxu0 0.0
        %492 = vmatprep.subr.mxu0 0.0
        %493 = vmatpush2.msra.mxu0 0.0
        %494 = vmatprep.subr.mxu0 0.0
        %495 = vmatpush2.msra.mxu0 0.0
        %496 = vmatprep.subr.mxu0 0.0
        %497 = vmatpush2.msra.mxu0 0.0
        %498 = vmatprep.subr.mxu0 0.0
        %499 = vmatpush2.msra.mxu0 0.0
        %500 = vmatprep.subr.mxu0 0.0
        %501 = vmatpush2.msra.mxu0 0.0
        %502 = vmatprep.subr.mxu0 0.0
        %503 = vmatpush2.msra.mxu0 0.0
        %504 = vmatprep.mubr.f32.mxu0 0.0
        %505 = vmatmul.mubr.f32.gmra.mxu0 %v341
        %v506 = vpop.f32.mrf.mxu0
        %v507 = vadd.f32 0.0, %v506
        %v508 = vpop.f32.mrf.mxu0
        %509 = vmatprep.mubr.f32.mxu0 0.0
        %510 = vmatmul.mubr.f32.gmra.mxu0 %v344
        %v511 = vpop.f32.mrf.mxu0
        %v512 = vadd.f32 0.0, %v511
        %v513 = vpop.f32.mrf.mxu0
        %514 = vmatprep.mubr.f32.mxu0 0.0
        %515 = vmatmul.mubr.f32.gmra.mxu0 %v347
        %v516 = vpop.f32.mrf.mxu0
        %v517 = vadd.f32 0.0, %v516
        %v518 = vpop.f32.mrf.mxu0
        %519 = vmatprep.mubr.f32.mxu0 0.0
        %520 = vmatmul.mubr.f32.gmra.mxu0 %v350
        %v521 = vpop.f32.mrf.mxu0
        %v522 = vadd.f32 0.0, %v521
        %v523 = vpop.f32.mrf.mxu0
        %524 = vmatprep.mubr.f32.mxu0 0.0
        %525 = vmatmul.mubr.f32.gmra.mxu0 %v353
        %v526 = vpop.f32.mrf.mxu0
        %v527 = vadd.f32 0.0, %v526
        %v528 = vpop.f32.mrf.mxu0
        %529 = vmatprep.mubr.f32.mxu0 0.0
        %530 = vmatmul.mubr.f32.gmra.mxu0 %v356
        %v531 = vpop.f32.mrf.mxu0
        %v532 = vadd.f32 0.0, %v531
        %v533 = vpop.f32.mrf.mxu0
        %534 = vmatprep.mubr.f32.mxu0 0.0
        %535 = vmatmul.mubr.f32.gmra.mxu0 %v359
        %v536 = vpop.f32.mrf.mxu0
        %v537 = vadd.f32 0.0, %v536
        %v538 = vpop.f32.mrf.mxu0
        %539 = vmatprep.mubr.f32.mxu0 0.0
        %540 = vmatmul.mubr.f32.gmra.mxu0 %v362
        %v541 = vpop.f32.mrf.mxu0
        %v542 = vadd.f32 0.0, %v541
        %v543 = vpop.f32.mrf.mxu0
        %544 = vmatprep.mubr.f32.mxu0 0.0
        %545 = vmatmul.mubr.f32.gmra.mxu0 %v365
        %v546 = vpop.f32.mrf.mxu0
        %v547 = vadd.f32 0.0, %v546
        %v548 = vpop.f32.mrf.mxu0
        %549 = vmatprep.mubr.f32.mxu0 0.0
        %550 = vmatmul.mubr.f32.gmra.mxu0 %v368
        %v551 = vpop.f32.mrf.mxu0
        %v552 = vadd.f32 0.0, %v551
        %v553 = vpop.f32.mrf.mxu0
        %554 = vmatprep.mubr.f32.mxu0 0.0
        %555 = vmatmul.mubr.f32.gmra.mxu0 %v371
        %v556 = vpop.f32.mrf.mxu0
        %v557 = vadd.f32 0.0, %v556
        %v558 = vpop.f32.mrf.mxu0
        %559 = vmatprep.mubr.f32.mxu0 0.0
        %560 = vmatmul.mubr.f32.gmra.mxu0 %v374
        %v561 = vpop.f32.mrf.mxu0
        %v562 = vadd.f32 0.0, %v561
        %v563 = vpop.f32.mrf.mxu0
        %564 = vmatprep.mubr.f32.mxu0 0.0
        %565 = vmatmul.mubr.f32.gmra.mxu0 %v377
        %v566 = vpop.f32.mrf.mxu0
        %v567 = vadd.f32 0.0, %v566
        %v568 = vpop.f32.mrf.mxu0
        %569 = vmatprep.mubr.f32.mxu0 0.0
        %570 = vmatmul.mubr.f32.gmra.mxu0 %v380
        %v571 = vpop.f32.mrf.mxu0
        %v572 = vadd.f32 0.0, %v571
        %v573 = vpop.f32.mrf.mxu0
        %574 = vmatprep.mubr.f32.mxu0 0.0
        %575 = vmatmul.mubr.f32.gmra.mxu0 %v383
        %v576 = vpop.f32.mrf.mxu0
        %v577 = vadd.f32 0.0, %v576
        %v578 = vpop.f32.mrf.mxu0
        %579 = vmatprep.mubr.f32.mxu0 0.0
        %580 = vmatmul.mubr.f32.gmra.mxu0 %v386
        %v581 = vpop.f32.mrf.mxu0
        %v582 = vadd.f32 0.0, %v581
        %v583 = vpop.f32.mrf.mxu0
        %584 = vmatprep.mubr.f32.mxu0 0.0
        %585 = vmatmul.mubr.f32.gmra.mxu0 %v389
        %v586 = vpop.f32.mrf.mxu0
        %v587 = vadd.f32 0.0, %v586
        %v588 = vpop.f32.mrf.mxu0
        %589 = vmatprep.mubr.f32.mxu0 0.0
        %590 = vmatmul.mubr.f32.gmra.mxu0 %v392
        %v591 = vpop.f32.mrf.mxu0
        %v592 = vadd.f32 0.0, %v591
        %v593 = vpop.f32.mrf.mxu0
        %594 = vmatprep.mubr.f32.mxu0 0.0
        %595 = vmatmul.mubr.f32.gmra.mxu0 %v395
        %v596 = vpop.f32.mrf.mxu0
        %v597 = vadd.f32 0.0, %v596
        %v598 = vpop.f32.mrf.mxu0
        %599 = vmatprep.mubr.f32.mxu0 0.0
        %600 = vmatmul.mubr.f32.gmra.mxu0 %v398
        %v601 = vpop.f32.mrf.mxu0
        %v602 = vadd.f32 0.0, %v601
        %v603 = vpop.f32.mrf.mxu0
        %604 = vmatprep.mubr.f32.mxu0 0.0
        %605 = vmatmul.mubr.f32.gmra.mxu0 %v401
        %v606 = vpop.f32.mrf.mxu0
        %v607 = vadd.f32 0.0, %v606
        %v608 = vpop.f32.mrf.mxu0
        %609 = vmatprep.mubr.f32.mxu0 0.0
        %610 = vmatmul.mubr.f32.gmra.mxu0 %v404
        %v611 = vpop.f32.mrf.mxu0
        %v612 = vadd.f32 0.0, %v611
        %v613 = vpop.f32.mrf.mxu0
        %614 = vmatprep.mubr.f32.mxu0 0.0
        %615 = vmatmul.mubr.f32.gmra.mxu0 %v407
        %v616 = vpop.f32.mrf.mxu0
        %v617 = vadd.f32 0.0, %v616
        %v618 = vpop.f32.mrf.mxu0
        %619 = vmatprep.mubr.f32.mxu0 0.0
        %620 = vmatmul.mubr.f32.gmra.mxu0 %v410
        %v621 = vpop.f32.mrf.mxu0
        %v622 = vadd.f32 0.0, %v621
        %v623 = vpop.f32.mrf.mxu0
        %624 = vmatprep.mubr.f32.mxu0 0.0
        %625 = vmatmul.mubr.f32.gmra.mxu0 %v413
        %v626 = vpop.f32.mrf.mxu0
        %v627 = vadd.f32 0.0, %v626
        %v628 = vpop.f32.mrf.mxu0
        %629 = vmatprep.mubr.f32.mxu0 0.0
        %630 = vmatmul.mubr.f32.gmra.mxu0 %v416
        %v631 = vpop.f32.mrf.mxu0
        %v632 = vadd.f32 0.0, %v631
        %v633 = vpop.f32.mrf.mxu0
        %634 = vmatprep.mubr.f32.mxu0 0.0
        %635 = vmatmul.mubr.f32.gmra.mxu0 %v419
        %v636 = vpop.f32.mrf.mxu0
        %v637 = vadd.f32 0.0, %v636
        %v638 = vpop.f32.mrf.mxu0
        %639 = vmatprep.mubr.f32.mxu0 0.0
        %640 = vmatmul.mubr.f32.gmra.mxu0 %v422
        %v641 = vpop.f32.mrf.mxu0
        %v642 = vadd.f32 0.0, %v641
        %v643 = vpop.f32.mrf.mxu0
        %644 = vmatprep.mubr.f32.mxu0 0.0
        %645 = vmatmul.mubr.f32.gmra.mxu0 %v425
        %v646 = vpop.f32.mrf.mxu0
        %v647 = vadd.f32 0.0, %v646
        %v648 = vpop.f32.mrf.mxu0
        %649 = vmatprep.mubr.f32.mxu0 0.0
        %650 = vmatmul.mubr.f32.gmra.mxu0 %v428
        %v651 = vpop.f32.mrf.mxu0
        %v652 = vadd.f32 0.0, %v651
        %v653 = vpop.f32.mrf.mxu0
        %654 = vmatprep.mubr.f32.mxu0 0.0
        %655 = vmatmul.mubr.f32.gmra.mxu0 %v431
        %v656 = vpop.f32.mrf.mxu0
        %v657 = vadd.f32 0.0, %v656
        %v658 = vpop.f32.mrf.mxu0
        %659 = vmatprep.mubr.f32.mxu0 0.0
        %660 = vmatmul.mubr.f32.gmra.mxu0 %v434
        %v661 = vpop.f32.mrf.mxu0
        %v662 = vadd.f32 0.0, %v661
        %v663 = vpop.f32.mrf.mxu0
        %664 = vdwg.mxu0
        %v665 = vmax.f32 %v507, 0.0
        %v666 = vmax.f32 %v512, 0.0
        %v667 = vmax.f32 %v517, 0.0
        %v668 = vmax.f32 %v522, 0.0
        %v669 = vmax.f32 %v527, 0.0
        %v670 = vmax.f32 %v532, 0.0
        %v671 = vmax.f32 %v537, 0.0
        %v672 = vmax.f32 %v542, 0.0
        %v673 = vmax.f32 %v547, 0.0
        %v674 = vmax.f32 %v552, 0.0
        %v675 = vmax.f32 %v557, 0.0
        %v676 = vmax.f32 %v562, 0.0
        %v677 = vmax.f32 %v567, 0.0
        %v678 = vmax.f32 %v572, 0.0
        %v679 = vmax.f32 %v577, 0.0
        %v680 = vmax.f32 %v582, 0.0
        %v681 = vmax.f32 %v587, 0.0
        %v682 = vmax.f32 %v592, 0.0
        %v683 = vmax.f32 %v597, 0.0
        %v684 = vmax.f32 %v602, 0.0
        %v685 = vmax.f32 %v607, 0.0
        %v686 = vmax.f32 %v612, 0.0
        %v687 = vmax.f32 %v617, 0.0
        %v688 = vmax.f32 %v622, 0.0
        %v689 = vmax.f32 %v627, 0.0
        %v690 = vmax.f32 %v632, 0.0
        %v691 = vmax.f32 %v637, 0.0
        %v692 = vmax.f32 %v642, 0.0
        %v693 = vmax.f32 %v647, 0.0
        %v694 = vmax.f32 %v652, 0.0
        %v695 = vmax.f32 %v657, 0.0
        %v696 = vmax.f32 %v662, 0.0
        %v697 = vld [vmem:[%s3] sm:$0xff]
        %v698 = vld [vmem:[%s3 + $0x8] sm:$0xff]
        %v699 = vld [vmem:[%s3 + $0x10] sm:$0xff]
        %v700 = vld [vmem:[%s3 + $0x18] sm:$0xff]
        %v701 = vld [vmem:[%s3 + $0x20] sm:$0x1]
        %v703 = vsel %vm339, %v665, 0
        %v706 = vsel %vm339, %v666, 0
        %v709 = vsel %vm339, %v667, 0
        %v712 = vsel %vm339, %v668, 0
        %v715 = vsel %vm339, %v669, 0
        %v718 = vsel %vm339, %v670, 0
        %v721 = vsel %vm339, %v671, 0
        %v724 = vsel %vm339, %v672, 0
        %v727 = vsel %vm339, %v673, 0
        %v730 = vsel %vm339, %v674, 0
        %v733 = vsel %vm339, %v675, 0
        %v736 = vsel %vm339, %v676, 0
        %v739 = vsel %vm339, %v677, 0
        %v742 = vsel %vm339, %v678, 0
        %v745 = vsel %vm339, %v679, 0
        %v748 = vsel %vm339, %v680, 0
        %v751 = vsel %vm339, %v681, 0
        %v754 = vsel %vm339, %v682, 0
        %v757 = vsel %vm339, %v683, 0
        %v760 = vsel %vm339, %v684, 0
        %v763 = vsel %vm339, %v685, 0
        %v766 = vsel %vm339, %v686, 0
        %v769 = vsel %vm339, %v687, 0
        %v772 = vsel %vm339, %v688, 0
        %v775 = vsel %vm339, %v689, 0
        %v778 = vsel %vm339, %v690, 0
        %v781 = vsel %vm339, %v691, 0
        %v784 = vsel %vm339, %v692, 0
        %v787 = vsel %vm339, %v693, 0
        %v790 = vsel %vm339, %v694, 0
        %v793 = vsel %vm339, %v695, 0
        %v796 = vsel %vm339, %v696, 0
        %v799 = vsel %vm436, %v701, 0
        %801 = vmatprep.subr.mxu0 0.0
        %802 = vmatpush1.msra.mxu0 0.0
        %803 = vmatprep.subr.mxu0 0.0
        %804 = vmatpush1.msra.mxu0 0.0
        %805 = vmatprep.subr.mxu0 0.0
        %806 = vmatpush1.msra.mxu0 0.0
        %807 = vmatprep.subr.mxu0 0.0
        %808 = vmatpush1.msra.mxu0 0.0
        %809 = vmatprep.subr.mxu0 0.0
        %810 = vmatpush1.msra.mxu0 0.0
        %811 = vmatprep.subr.mxu0 0.0
        %812 = vmatpush1.msra.mxu0 0.0
        %813 = vmatprep.subr.mxu0 0.0
        %814 = vmatpush1.msra.mxu0 0.0
        %815 = vmatprep.subr.mxu0 0.0
        %816 = vmatpush1.msra.mxu0 0.0
        %817 = vmatprep.subr.mxu0 0.0
        %818 = vmatpush1.msra.mxu0 0.0
        %819 = vmatprep.subr.mxu0 0.0
        %820 = vmatpush1.msra.mxu0 0.0
        %821 = vmatprep.subr.mxu0 0.0
        %822 = vmatpush1.msra.mxu0 0.0
        %823 = vmatprep.subr.mxu0 0.0
        %824 = vmatpush1.msra.mxu0 %v799
        %825 = vmatprep.subr.mxu0 0.0
        %826 = vmatpush1.msra.mxu0 %v700
        %827 = vmatprep.subr.mxu0 0.0
        %828 = vmatpush1.msra.mxu0 %v699
        %829 = vmatprep.subr.mxu0 0.0
        %830 = vmatpush1.msra.mxu0 %v698
        %831 = vmatprep.subr.mxu0 0.0
        %832 = vmatpush1.msra.mxu0 %v697
        %833 = vmatprep.subr.mxu0 0.0
        %834 = vmatpush2.msra.mxu0 0.0
        %835 = vmatprep.subr.mxu0 0.0
        %836 = vmatpush2.msra.mxu0 0.0
        %837 = vmatprep.subr.mxu0 0.0
        %838 = vmatpush2.msra.mxu0 0.0
        %839 = vmatprep.subr.mxu0 0.0
        %840 = vmatpush2.msra.mxu0 0.0
        %841 = vmatprep.subr.mxu0 0.0
        %842 = vmatpush2.msra.mxu0 0.0
        %843 = vmatprep.subr.mxu0 0.0
        %844 = vmatpush2.msra.mxu0 0.0
        %845 = vmatprep.subr.mxu0 0.0
        %846 = vmatpush2.msra.mxu0 0.0
        %847 = vmatprep.subr.mxu0 0.0
        %848 = vmatpush2.msra.mxu0 0.0
        %849 = vmatprep.subr.mxu0 0.0
        %850 = vmatpush2.msra.mxu0 0.0
        %851 = vmatprep.subr.mxu0 0.0
        %852 = vmatpush2.msra.mxu0 0.0
        %853 = vmatprep.subr.mxu0 0.0
        %854 = vmatpush2.msra.mxu0 0.0
        %855 = vmatprep.subr.mxu0 0.0
        %856 = vmatpush2.msra.mxu0 0.0
        %857 = vmatprep.subr.mxu0 0.0
        %858 = vmatpush2.msra.mxu0 0.0
        %859 = vmatprep.subr.mxu0 0.0
        %860 = vmatpush2.msra.mxu0 0.0
        %861 = vmatprep.subr.mxu0 0.0
        %862 = vmatpush2.msra.mxu0 0.0
        %863 = vmatprep.subr.mxu0 0.0
        %864 = vmatpush2.msra.mxu0 0.0
        %865 = vmatprep.mubr.f32.mxu0 0.0
        %866 = vmatmul.mubr.f32.gmra.mxu0 %v703
        %v867 = vpop.f32.mrf.mxu0
        %v868 = vadd.f32 0.0, %v867
        %v869 = vpop.f32.mrf.mxu0
        %870 = vmatprep.mubr.f32.mxu0 0.0
        %871 = vmatmul.mubr.f32.gmra.mxu0 %v706
        %v872 = vpop.f32.mrf.mxu0
        %v873 = vadd.f32 0.0, %v872
        %v874 = vpop.f32.mrf.mxu0
        %875 = vmatprep.mubr.f32.mxu0 0.0
        %876 = vmatmul.mubr.f32.gmra.mxu0 %v709
        %v877 = vpop.f32.mrf.mxu0
        %v878 = vadd.f32 0.0, %v877
        %v879 = vpop.f32.mrf.mxu0
        %880 = vmatprep.mubr.f32.mxu0 0.0
        %881 = vmatmul.mubr.f32.gmra.mxu0 %v712
        %v882 = vpop.f32.mrf.mxu0
        %v883 = vadd.f32 0.0, %v882
        %v884 = vpop.f32.mrf.mxu0
        %885 = vmatprep.mubr.f32.mxu0 0.0
        %886 = vmatmul.mubr.f32.gmra.mxu0 %v715
        %v887 = vpop.f32.mrf.mxu0
        %v888 = vadd.f32 0.0, %v887
        %v889 = vpop.f32.mrf.mxu0
        %890 = vmatprep.mubr.f32.mxu0 0.0
        %891 = vmatmul.mubr.f32.gmra.mxu0 %v718
        %v892 = vpop.f32.mrf.mxu0
        %v893 = vadd.f32 0.0, %v892
        %v894 = vpop.f32.mrf.mxu0
        %895 = vmatprep.mubr.f32.mxu0 0.0
        %896 = vmatmul.mubr.f32.gmra.mxu0 %v721
        %v897 = vpop.f32.mrf.mxu0
        %v898 = vadd.f32 0.0, %v897
        %v899 = vpop.f32.mrf.mxu0
        %900 = vmatprep.mubr.f32.mxu0 0.0
        %901 = vmatmul.mubr.f32.gmra.mxu0 %v724
        %v902 = vpop.f32.mrf.mxu0
        %v903 = vadd.f32 0.0, %v902
        %v904 = vpop.f32.mrf.mxu0
        %905 = vmatprep.mubr.f32.mxu0 0.0
        %906 = vmatmul.mubr.f32.gmra.mxu0 %v727
        %v907 = vpop.f32.mrf.mxu0
        %v908 = vadd.f32 0.0, %v907
        %v909 = vpop.f32.mrf.mxu0
        %910 = vmatprep.mubr.f32.mxu0 0.0
        %911 = vmatmul.mubr.f32.gmra.mxu0 %v730
        %v912 = vpop.f32.mrf.mxu0
        %v913 = vadd.f32 0.0, %v912
        %v914 = vpop.f32.mrf.mxu0
        %915 = vmatprep.mubr.f32.mxu0 0.0
        %916 = vmatmul.mubr.f32.gmra.mxu0 %v733
        %v917 = vpop.f32.mrf.mxu0
        %v918 = vadd.f32 0.0, %v917
        %v919 = vpop.f32.mrf.mxu0
        %920 = vmatprep.mubr.f32.mxu0 0.0
        %921 = vmatmul.mubr.f32.gmra.mxu0 %v736
        %v922 = vpop.f32.mrf.mxu0
        %v923 = vadd.f32 0.0, %v922
        %v924 = vpop.f32.mrf.mxu0
        %925 = vmatprep.mubr.f32.mxu0 0.0
        %926 = vmatmul.mubr.f32.gmra.mxu0 %v739
        %v927 = vpop.f32.mrf.mxu0
        %v928 = vadd.f32 0.0, %v927
        %v929 = vpop.f32.mrf.mxu0
        %930 = vmatprep.mubr.f32.mxu0 0.0
        %931 = vmatmul.mubr.f32.gmra.mxu0 %v742
        %v932 = vpop.f32.mrf.mxu0
        %v933 = vadd.f32 0.0, %v932
        %v934 = vpop.f32.mrf.mxu0
        %935 = vmatprep.mubr.f32.mxu0 0.0
        %936 = vmatmul.mubr.f32.gmra.mxu0 %v745
        %v937 = vpop.f32.mrf.mxu0
        %v938 = vadd.f32 0.0, %v937
        %v939 = vpop.f32.mrf.mxu0
        %940 = vmatprep.mubr.f32.mxu0 0.0
        %941 = vmatmul.mubr.f32.gmra.mxu0 %v748
        %v942 = vpop.f32.mrf.mxu0
        %v943 = vadd.f32 0.0, %v942
        %v944 = vpop.f32.mrf.mxu0
        %945 = vmatprep.mubr.f32.mxu0 0.0
        %946 = vmatmul.mubr.f32.gmra.mxu0 %v751
        %v947 = vpop.f32.mrf.mxu0
        %v948 = vadd.f32 0.0, %v947
        %v949 = vpop.f32.mrf.mxu0
        %950 = vmatprep.mubr.f32.mxu0 0.0
        %951 = vmatmul.mubr.f32.gmra.mxu0 %v754
        %v952 = vpop.f32.mrf.mxu0
        %v953 = vadd.f32 0.0, %v952
        %v954 = vpop.f32.mrf.mxu0
        %955 = vmatprep.mubr.f32.mxu0 0.0
        %956 = vmatmul.mubr.f32.gmra.mxu0 %v757
        %v957 = vpop.f32.mrf.mxu0
        %v958 = vadd.f32 0.0, %v957
        %v959 = vpop.f32.mrf.mxu0
        %960 = vmatprep.mubr.f32.mxu0 0.0
        %961 = vmatmul.mubr.f32.gmra.mxu0 %v760
        %v962 = vpop.f32.mrf.mxu0
        %v963 = vadd.f32 0.0, %v962
        %v964 = vpop.f32.mrf.mxu0
        %965 = vmatprep.mubr.f32.mxu0 0.0
        %966 = vmatmul.mubr.f32.gmra.mxu0 %v763
        %v967 = vpop.f32.mrf.mxu0
        %v968 = vadd.f32 0.0, %v967
        %v969 = vpop.f32.mrf.mxu0
        %970 = vmatprep.mubr.f32.mxu0 0.0
        %971 = vmatmul.mubr.f32.gmra.mxu0 %v766
        %v972 = vpop.f32.mrf.mxu0
        %v973 = vadd.f32 0.0, %v972
        %v974 = vpop.f32.mrf.mxu0
        %975 = vmatprep.mubr.f32.mxu0 0.0
        %976 = vmatmul.mubr.f32.gmra.mxu0 %v769
        %v977 = vpop.f32.mrf.mxu0
        %v978 = vadd.f32 0.0, %v977
        %v979 = vpop.f32.mrf.mxu0
        %980 = vmatprep.mubr.f32.mxu0 0.0
        %981 = vmatmul.mubr.f32.gmra.mxu0 %v772
        %v982 = vpop.f32.mrf.mxu0
        %v983 = vadd.f32 0.0, %v982
        %v984 = vpop.f32.mrf.mxu0
        %985 = vmatprep.mubr.f32.mxu0 0.0
        %986 = vmatmul.mubr.f32.gmra.mxu0 %v775
        %v987 = vpop.f32.mrf.mxu0
        %v988 = vadd.f32 0.0, %v987
        %v989 = vpop.f32.mrf.mxu0
        %990 = vmatprep.mubr.f32.mxu0 0.0
        %991 = vmatmul.mubr.f32.gmra.mxu0 %v778
        %v992 = vpop.f32.mrf.mxu0
        %v993 = vadd.f32 0.0, %v992
        %v994 = vpop.f32.mrf.mxu0
        %995 = vmatprep.mubr.f32.mxu0 0.0
        %996 = vmatmul.mubr.f32.gmra.mxu0 %v781
        %v997 = vpop.f32.mrf.mxu0
        %v998 = vadd.f32 0.0, %v997
        %v999 = vpop.f32.mrf.mxu0
        %1000 = vmatprep.mubr.f32.mxu0 0.0
        %1001 = vmatmul.mubr.f32.gmra.mxu0 %v784
        %v1002 = vpop.f32.mrf.mxu0
        %v1003 = vadd.f32 0.0, %v1002
        %v1004 = vpop.f32.mrf.mxu0
        %1005 = vmatprep.mubr.f32.mxu0 0.0
        %1006 = vmatmul.mubr.f32.gmra.mxu0 %v787
        %v1007 = vpop.f32.mrf.mxu0
        %v1008 = vadd.f32 0.0, %v1007
        %v1009 = vpop.f32.mrf.mxu0
        %1010 = vmatprep.mubr.f32.mxu0 0.0
        %1011 = vmatmul.mubr.f32.gmra.mxu0 %v790
        %v1012 = vpop.f32.mrf.mxu0
        %v1013 = vadd.f32 0.0, %v1012
        %v1014 = vpop.f32.mrf.mxu0
        %1015 = vmatprep.mubr.f32.mxu0 0.0
        %1016 = vmatmul.mubr.f32.gmra.mxu0 %v793
        %v1017 = vpop.f32.mrf.mxu0
        %v1018 = vadd.f32 0.0, %v1017
        %v1019 = vpop.f32.mrf.mxu0
        %1020 = vmatprep.mubr.f32.mxu0 0.0
        %1021 = vmatmul.mubr.f32.gmra.mxu0 %v796
        %v1022 = vpop.f32.mrf.mxu0
        %v1023 = vadd.f32 0.0, %v1022
        %v1024 = vpop.f32.mrf.mxu0
        %1025 = vdwg.mxu0
        %v1026 = vld [vmem:[%s4] sm:$0xff]
        %v1027 = vld [vmem:[%s4 + $0x8] sm:$0xff]
        %v1028 = vld [vmem:[%s4 + $0x10] sm:$0xff]
        %v1029 = vld [vmem:[%s4 + $0x18] sm:$0xff]
        %v1030 = vld [vmem:[%s4 + $0x20] sm:$0x1]
        %v1032 = vsel %vm436, %v1030, 0
        %1034 = vmatprep.subr.mxu0 0.0
        %1035 = vmatpush1.msra.mxu0 0.0
        %1036 = vmatprep.subr.mxu0 0.0
        %1037 = vmatpush1.msra.mxu0 0.0
        %1038 = vmatprep.subr.mxu0 0.0
        %1039 = vmatpush1.msra.mxu0 0.0
        %1040 = vmatprep.subr.mxu0 0.0
        %1041 = vmatpush1.msra.mxu0 0.0
        %1042 = vmatprep.subr.mxu0 0.0
        %1043 = vmatpush1.msra.mxu0 0.0
        %1044 = vmatprep.subr.mxu0 0.0
        %1045 = vmatpush1.msra.mxu0 0.0
        %1046 = vmatprep.subr.mxu0 0.0
        %1047 = vmatpush1.msra.mxu0 0.0
        %1048 = vmatprep.subr.mxu0 0.0
        %1049 = vmatpush1.msra.mxu0 0.0
        %1050 = vmatprep.subr.mxu0 0.0
        %1051 = vmatpush1.msra.mxu0 0.0
        %1052 = vmatprep.subr.mxu0 0.0
        %1053 = vmatpush1.msra.mxu0 0.0
        %1054 = vmatprep.subr.mxu0 0.0
        %1055 = vmatpush1.msra.mxu0 0.0
        %1056 = vmatprep.subr.mxu0 0.0
        %1057 = vmatpush1.msra.mxu0 %v1032
        %1058 = vmatprep.subr.mxu0 0.0
        %1059 = vmatpush1.msra.mxu0 %v1029
        %1060 = vmatprep.subr.mxu0 0.0
        %1061 = vmatpush1.msra.mxu0 %v1028
        %1062 = vmatprep.subr.mxu0 0.0
        %1063 = vmatpush1.msra.mxu0 %v1027
        %1064 = vmatprep.subr.mxu0 0.0
        %1065 = vmatpush1.msra.mxu0 %v1026
        %1066 = vmatprep.subr.mxu0 0.0
        %1067 = vmatpush2.msra.mxu0 0.0
        %1068 = vmatprep.subr.mxu0 0.0
        %1069 = vmatpush2.msra.mxu0 0.0
        %1070 = vmatprep.subr.mxu0 0.0
        %1071 = vmatpush2.msra.mxu0 0.0
        %1072 = vmatprep.subr.mxu0 0.0
        %1073 = vmatpush2.msra.mxu0 0.0
        %1074 = vmatprep.subr.mxu0 0.0
        %1075 = vmatpush2.msra.mxu0 0.0
        %1076 = vmatprep.subr.mxu0 0.0
        %1077 = vmatpush2.msra.mxu0 0.0
        %1078 = vmatprep.subr.mxu0 0.0
        %1079 = vmatpush2.msra.mxu0 0.0
        %1080 = vmatprep.subr.mxu0 0.0
        %1081 = vmatpush2.msra.mxu0 0.0
        %1082 = vmatprep.subr.mxu0 0.0
        %1083 = vmatpush2.msra.mxu0 0.0
        %1084 = vmatprep.subr.mxu0 0.0
        %1085 = vmatpush2.msra.mxu0 0.0
        %1086 = vmatprep.subr.mxu0 0.0
        %1087 = vmatpush2.msra.mxu0 0.0
        %1088 = vmatprep.subr.mxu0 0.0
        %1089 = vmatpush2.msra.mxu0 0.0
        %1090 = vmatprep.subr.mxu0 0.0
        %1091 = vmatpush2.msra.mxu0 0.0
        %1092 = vmatprep.subr.mxu0 0.0
        %1093 = vmatpush2.msra.mxu0 0.0
        %1094 = vmatprep.subr.mxu0 0.0
        %1095 = vmatpush2.msra.mxu0 0.0
        %1096 = vmatprep.subr.mxu0 0.0
        %1097 = vmatpush2.msra.mxu0 0.0
        %1098 = vmatprep.mubr.f32.mxu0 0.0
        %1099 = vmatmul.mubr.f32.gmra.mxu0 %v703
        %v1100 = vpop.f32.mrf.mxu0
        %v1101 = vadd.f32 0.0, %v1100
        %v1102 = vpop.f32.mrf.mxu0
        %1103 = vmatprep.mubr.f32.mxu0 0.0
        %1104 = vmatmul.mubr.f32.gmra.mxu0 %v706
        %v1105 = vpop.f32.mrf.mxu0
        %v1106 = vadd.f32 0.0, %v1105
        %v1107 = vpop.f32.mrf.mxu0
        %1108 = vmatprep.mubr.f32.mxu0 0.0
        %1109 = vmatmul.mubr.f32.gmra.mxu0 %v709
        %v1110 = vpop.f32.mrf.mxu0
        %v1111 = vadd.f32 0.0, %v1110
        %v1112 = vpop.f32.mrf.mxu0
        %1113 = vmatprep.mubr.f32.mxu0 0.0
        %1114 = vmatmul.mubr.f32.gmra.mxu0 %v712
        %v1115 = vpop.f32.mrf.mxu0
        %v1116 = vadd.f32 0.0, %v1115
        %v1117 = vpop.f32.mrf.mxu0
        %1118 = vmatprep.mubr.f32.mxu0 0.0
        %1119 = vmatmul.mubr.f32.gmra.mxu0 %v715
        %v1120 = vpop.f32.mrf.mxu0
        %v1121 = vadd.f32 0.0, %v1120
        %v1122 = vpop.f32.mrf.mxu0
        %1123 = vmatprep.mubr.f32.mxu0 0.0
        %1124 = vmatmul.mubr.f32.gmra.mxu0 %v718
        %v1125 = vpop.f32.mrf.mxu0
        %v1126 = vadd.f32 0.0, %v1125
        %v1127 = vpop.f32.mrf.mxu0
        %1128 = vmatprep.mubr.f32.mxu0 0.0
        %1129 = vmatmul.mubr.f32.gmra.mxu0 %v721
        %v1130 = vpop.f32.mrf.mxu0
        %v1131 = vadd.f32 0.0, %v1130
        %v1132 = vpop.f32.mrf.mxu0
        %1133 = vmatprep.mubr.f32.mxu0 0.0
        %1134 = vmatmul.mubr.f32.gmra.mxu0 %v724
        %v1135 = vpop.f32.mrf.mxu0
        %v1136 = vadd.f32 0.0, %v1135
        %v1137 = vpop.f32.mrf.mxu0
        %1138 = vmatprep.mubr.f32.mxu0 0.0
        %1139 = vmatmul.mubr.f32.gmra.mxu0 %v727
        %v1140 = vpop.f32.mrf.mxu0
        %v1141 = vadd.f32 0.0, %v1140
        %v1142 = vpop.f32.mrf.mxu0
        %1143 = vmatprep.mubr.f32.mxu0 0.0
        %1144 = vmatmul.mubr.f32.gmra.mxu0 %v730
        %v1145 = vpop.f32.mrf.mxu0
        %v1146 = vadd.f32 0.0, %v1145
        %v1147 = vpop.f32.mrf.mxu0
        %1148 = vmatprep.mubr.f32.mxu0 0.0
        %1149 = vmatmul.mubr.f32.gmra.mxu0 %v733
        %v1150 = vpop.f32.mrf.mxu0
        %v1151 = vadd.f32 0.0, %v1150
        %v1152 = vpop.f32.mrf.mxu0
        %1153 = vmatprep.mubr.f32.mxu0 0.0
        %1154 = vmatmul.mubr.f32.gmra.mxu0 %v736
        %v1155 = vpop.f32.mrf.mxu0
        %v1156 = vadd.f32 0.0, %v1155
        %v1157 = vpop.f32.mrf.mxu0
        %1158 = vmatprep.mubr.f32.mxu0 0.0
        %1159 = vmatmul.mubr.f32.gmra.mxu0 %v739
        %v1160 = vpop.f32.mrf.mxu0
        %v1161 = vadd.f32 0.0, %v1160
        %v1162 = vpop.f32.mrf.mxu0
        %1163 = vmatprep.mubr.f32.mxu0 0.0
        %1164 = vmatmul.mubr.f32.gmra.mxu0 %v742
        %v1165 = vpop.f32.mrf.mxu0
        %v1166 = vadd.f32 0.0, %v1165
        %v1167 = vpop.f32.mrf.mxu0
        %1168 = vmatprep.mubr.f32.mxu0 0.0
        %1169 = vmatmul.mubr.f32.gmra.mxu0 %v745
        %v1170 = vpop.f32.mrf.mxu0
        %v1171 = vadd.f32 0.0, %v1170
        %v1172 = vpop.f32.mrf.mxu0
        %1173 = vmatprep.mubr.f32.mxu0 0.0
        %1174 = vmatmul.mubr.f32.gmra.mxu0 %v748
        %v1175 = vpop.f32.mrf.mxu0
        %v1176 = vadd.f32 0.0, %v1175
        %v1177 = vpop.f32.mrf.mxu0
        %1178 = vmatprep.mubr.f32.mxu0 0.0
        %1179 = vmatmul.mubr.f32.gmra.mxu0 %v751
        %v1180 = vpop.f32.mrf.mxu0
        %v1181 = vadd.f32 0.0, %v1180
        %v1182 = vpop.f32.mrf.mxu0
        %1183 = vmatprep.mubr.f32.mxu0 0.0
        %1184 = vmatmul.mubr.f32.gmra.mxu0 %v754
        %v1185 = vpop.f32.mrf.mxu0
        %v1186 = vadd.f32 0.0, %v1185
        %v1187 = vpop.f32.mrf.mxu0
        %1188 = vmatprep.mubr.f32.mxu0 0.0
        %1189 = vmatmul.mubr.f32.gmra.mxu0 %v757
        %v1190 = vpop.f32.mrf.mxu0
        %v1191 = vadd.f32 0.0, %v1190
        %v1192 = vpop.f32.mrf.mxu0
        %1193 = vmatprep.mubr.f32.mxu0 0.0
        %1194 = vmatmul.mubr.f32.gmra.mxu0 %v760
        %v1195 = vpop.f32.mrf.mxu0
        %v1196 = vadd.f32 0.0, %v1195
        %v1197 = vpop.f32.mrf.mxu0
        %1198 = vmatprep.mubr.f32.mxu0 0.0
        %1199 = vmatmul.mubr.f32.gmra.mxu0 %v763
        %v1200 = vpop.f32.mrf.mxu0
        %v1201 = vadd.f32 0.0, %v1200
        %v1202 = vpop.f32.mrf.mxu0
        %1203 = vmatprep.mubr.f32.mxu0 0.0
        %1204 = vmatmul.mubr.f32.gmra.mxu0 %v766
        %v1205 = vpop.f32.mrf.mxu0
        %v1206 = vadd.f32 0.0, %v1205
        %v1207 = vpop.f32.mrf.mxu0
        %1208 = vmatprep.mubr.f32.mxu0 0.0
        %1209 = vmatmul.mubr.f32.gmra.mxu0 %v769
        %v1210 = vpop.f32.mrf.mxu0
        %v1211 = vadd.f32 0.0, %v1210
        %v1212 = vpop.f32.mrf.mxu0
        %1213 = vmatprep.mubr.f32.mxu0 0.0
        %1214 = vmatmul.mubr.f32.gmra.mxu0 %v772
        %v1215 = vpop.f32.mrf.mxu0
        %v1216 = vadd.f32 0.0, %v1215
        %v1217 = vpop.f32.mrf.mxu0
        %1218 = vmatprep.mubr.f32.mxu0 0.0
        %1219 = vmatmul.mubr.f32.gmra.mxu0 %v775
        %v1220 = vpop.f32.mrf.mxu0
        %v1221 = vadd.f32 0.0, %v1220
        %v1222 = vpop.f32.mrf.mxu0
        %1223 = vmatprep.mubr.f32.mxu0 0.0
        %1224 = vmatmul.mubr.f32.gmra.mxu0 %v778
        %v1225 = vpop.f32.mrf.mxu0
        %v1226 = vadd.f32 0.0, %v1225
        %v1227 = vpop.f32.mrf.mxu0
        %1228 = vmatprep.mubr.f32.mxu0 0.0
        %1229 = vmatmul.mubr.f32.gmra.mxu0 %v781
        %v1230 = vpop.f32.mrf.mxu0
        %v1231 = vadd.f32 0.0, %v1230
        %v1232 = vpop.f32.mrf.mxu0
        %1233 = vmatprep.mubr.f32.mxu0 0.0
        %1234 = vmatmul.mubr.f32.gmra.mxu0 %v784
        %v1235 = vpop.f32.mrf.mxu0
        %v1236 = vadd.f32 0.0, %v1235
        %v1237 = vpop.f32.mrf.mxu0
        %1238 = vmatprep.mubr.f32.mxu0 0.0
        %1239 = vmatmul.mubr.f32.gmra.mxu0 %v787
        %v1240 = vpop.f32.mrf.mxu0
        %v1241 = vadd.f32 0.0, %v1240
        %v1242 = vpop.f32.mrf.mxu0
        %1243 = vmatprep.mubr.f32.mxu0 0.0
        %1244 = vmatmul.mubr.f32.gmra.mxu0 %v790
        %v1245 = vpop.f32.mrf.mxu0
        %v1246 = vadd.f32 0.0, %v1245
        %v1247 = vpop.f32.mrf.mxu0
        %1248 = vmatprep.mubr.f32.mxu0 0.0
        %1249 = vmatmul.mubr.f32.gmra.mxu0 %v793
        %v1250 = vpop.f32.mrf.mxu0
        %v1251 = vadd.f32 0.0, %v1250
        %v1252 = vpop.f32.mrf.mxu0
        %1253 = vmatprep.mubr.f32.mxu0 0.0
        %1254 = vmatmul.mubr.f32.gmra.mxu0 %v796
        %v1255 = vpop.f32.mrf.mxu0
        %v1256 = vadd.f32 0.0, %v1255
        %v1257 = vpop.f32.mrf.mxu0
        %1258 = vdwg.mxu0
        %v1259 = vmul.f32 %v1101, 0.5
        %v1260 = vmul.f32 %v1106, 0.5
        %v1261 = vmul.f32 %v1111, 0.5
        %v1262 = vmul.f32 %v1116, 0.5
        %v1263 = vmul.f32 %v1121, 0.5
        %v1264 = vmul.f32 %v1126, 0.5
        %v1265 = vmul.f32 %v1131, 0.5
        %v1266 = vmul.f32 %v1136, 0.5
        %v1267 = vmul.f32 %v1141, 0.5
        %v1268 = vmul.f32 %v1146, 0.5
        %v1269 = vmul.f32 %v1151, 0.5
        %v1270 = vmul.f32 %v1156, 0.5
        %v1271 = vmul.f32 %v1161, 0.5
        %v1272 = vmul.f32 %v1166, 0.5
        %v1273 = vmul.f32 %v1171, 0.5
        %v1274 = vmul.f32 %v1176, 0.5
        %v1275 = vmul.f32 %v1181, 0.5
        %v1276 = vmul.f32 %v1186, 0.5
        %v1277 = vmul.f32 %v1191, 0.5
        %v1278 = vmul.f32 %v1196, 0.5
        %v1279 = vmul.f32 %v1201, 0.5
        %v1280 = vmul.f32 %v1206, 0.5
        %v1281 = vmul.f32 %v1211, 0.5
        %v1282 = vmul.f32 %v1216, 0.5
        %v1283 = vmul.f32 %v1221, 0.5
        %v1284 = vmul.f32 %v1226, 0.5
        %v1285 = vmul.f32 %v1231, 0.5
        %v1286 = vmul.f32 %v1236, 0.5
        %v1287 = vmul.f32 %v1241, 0.5
        %v1288 = vmul.f32 %v1246, 0.5
        %v1289 = vmul.f32 %v1251, 0.5
        %v1290 = vmul.f32 %v1256, 0.5
        %v1291 = vmul.f32 %v1259, 1.442695
        %v1292 = vpow.pop %v1291
        %v1293 = vmul.f32 %v1260, 1.442695
        %v1294 = vpow.pop %v1293
        %v1295 = vmul.f32 %v1261, 1.442695
        %v1296 = vpow.pop %v1295
        %v1297 = vmul.f32 %v1262, 1.442695
        %v1298 = vpow.pop %v1297
        %v1299 = vmul.f32 %v1263, 1.442695
        %v1300 = vpow.pop %v1299
        %v1301 = vmul.f32 %v1264, 1.442695
        %v1302 = vpow.pop %v1301
        %v1303 = vmul.f32 %v1265, 1.442695
        %v1304 = vpow.pop %v1303
        %v1305 = vmul.f32 %v1266, 1.442695
        %v1306 = vpow.pop %v1305
        %v1307 = vmul.f32 %v1267, 1.442695
        %v1308 = vpow.pop %v1307
        %v1309 = vmul.f32 %v1268, 1.442695
        %v1310 = vpow.pop %v1309
        %v1311 = vmul.f32 %v1269, 1.442695
        %v1312 = vpow.pop %v1311
        %v1313 = vmul.f32 %v1270, 1.442695
        %v1314 = vpow.pop %v1313
        %v1315 = vmul.f32 %v1271, 1.442695
        %v1316 = vpow.pop %v1315
        %v1317 = vmul.f32 %v1272, 1.442695
        %v1318 = vpow.pop %v1317
        %v1319 = vmul.f32 %v1273, 1.442695
        %v1320 = vpow.pop %v1319
        %v1321 = vmul.f32 %v1274, 1.442695
        %v1322 = vpow.pop %v1321
        %v1323 = vmul.f32 %v1275, 1.442695
        %v1324 = vpow.pop %v1323
        %v1325 = vmul.f32 %v1276, 1.442695
        %v1326 = vpow.pop %v1325
        %v1327 = vmul.f32 %v1277, 1.442695
        %v1328 = vpow.pop %v1327
        %v1329 = vmul.f32 %v1278, 1.442695
        %v1330 = vpow.pop %v1329
        %v1331 = vmul.f32 %v1279, 1.442695
        %v1332 = vpow.pop %v1331
        %v1333 = vmul.f32 %v1280, 1.442695
        %v1334 = vpow.pop %v1333
        %v1335 = vmul.f32 %v1281, 1.442695
        %v1336 = vpow.pop %v1335
        %v1337 = vmul.f32 %v1282, 1.442695
        %v1338 = vpow.pop %v1337
        %v1339 = vmul.f32 %v1283, 1.442695
        %v1340 = vpow.pop %v1339
        %v1341 = vmul.f32 %v1284, 1.442695
        %v1342 = vpow.pop %v1341
        %v1343 = vmul.f32 %v1285, 1.442695
        %v1344 = vpow.pop %v1343
        %v1345 = vmul.f32 %v1286, 1.442695
        %v1346 = vpow.pop %v1345
        %v1347 = vmul.f32 %v1287, 1.442695
        %v1348 = vpow.pop %v1347
        %v1349 = vmul.f32 %v1288, 1.442695
        %v1350 = vpow.pop %v1349
        %v1351 = vmul.f32 %v1289, 1.442695
        %v1352 = vpow.pop %v1351
        %v1353 = vmul.f32 %v1290, 1.442695
        %v1354 = vpow.pop %v1353
        %v1355 = vld [vmem:[%s299] sm:$0xff]
        %v1356 = vld [vmem:[%s299 + $0x8] sm:$0xff]
        %v1357 = vld [vmem:[%s299 + $0x10] sm:$0xff]
        %v1358 = vld [vmem:[%s299 + $0x18] sm:$0xff]
        %v1359 = vld [vmem:[%s299 + $0x20] sm:$0xff]
        %v1360 = vld [vmem:[%s299 + $0x28] sm:$0xff]
        %v1361 = vld [vmem:[%s299 + $0x30] sm:$0xff]
        %v1362 = vld [vmem:[%s299 + $0x38] sm:$0xff]
        %v1363 = vld [vmem:[%s299 + $0x40] sm:$0xff]
        %v1364 = vld [vmem:[%s299 + $0x48] sm:$0xff]
        %v1365 = vld [vmem:[%s299 + $0x50] sm:$0xff]
        %v1366 = vld [vmem:[%s299 + $0x58] sm:$0xff]
        %v1367 = vld [vmem:[%s299 + $0x60] sm:$0xff]
        %v1368 = vld [vmem:[%s299 + $0x68] sm:$0xff]
        %v1369 = vld [vmem:[%s299 + $0x70] sm:$0xff]
        %v1370 = vld [vmem:[%s299 + $0x78] sm:$0xff]
        %v1371 = vld [vmem:[%s299 + $0x80] sm:$0xff]
        %v1372 = vld [vmem:[%s299 + $0x88] sm:$0xff]
        %v1373 = vld [vmem:[%s299 + $0x90] sm:$0xff]
        %v1374 = vld [vmem:[%s299 + $0x98] sm:$0xff]
        %v1375 = vld [vmem:[%s299 + $0xa0] sm:$0xff]
        %v1376 = vld [vmem:[%s299 + $0xa8] sm:$0xff]
        %v1377 = vld [vmem:[%s299 + $0xb0] sm:$0xff]
        %v1378 = vld [vmem:[%s299 + $0xb8] sm:$0xff]
        %v1379 = vld [vmem:[%s299 + $0xc0] sm:$0xff]
        %v1380 = vld [vmem:[%s299 + $0xc8] sm:$0xff]
        %v1381 = vld [vmem:[%s299 + $0xd0] sm:$0xff]
        %v1382 = vld [vmem:[%s299 + $0xd8] sm:$0xff]
        %v1383 = vld [vmem:[%s299 + $0xe0] sm:$0xff]
        %v1384 = vld [vmem:[%s299 + $0xe8] sm:$0xff]
        %v1385 = vld [vmem:[%s299 + $0xf0] sm:$0xff]
        %v1386 = vld [vmem:[%s299 + $0xf8] sm:$0xff]
        %v1387 = vmul.f32 %v1292, %v1355
        %v1388 = vmul.f32 %v1294, %v1356
        %v1389 = vmul.f32 %v1296, %v1357
        %v1390 = vmul.f32 %v1298, %v1358
        %v1391 = vmul.f32 %v1300, %v1359
        %v1392 = vmul.f32 %v1302, %v1360
        %v1393 = vmul.f32 %v1304, %v1361
        %v1394 = vmul.f32 %v1306, %v1362
        %v1395 = vmul.f32 %v1308, %v1363
        %v1396 = vmul.f32 %v1310, %v1364
        %v1397 = vmul.f32 %v1312, %v1365
        %v1398 = vmul.f32 %v1314, %v1366
        %v1399 = vmul.f32 %v1316, %v1367
        %v1400 = vmul.f32 %v1318, %v1368
        %v1401 = vmul.f32 %v1320, %v1369
        %v1402 = vmul.f32 %v1322, %v1370
        %v1403 = vmul.f32 %v1324, %v1371
        %v1404 = vmul.f32 %v1326, %v1372
        %v1405 = vmul.f32 %v1328, %v1373
        %v1406 = vmul.f32 %v1330, %v1374
        %v1407 = vmul.f32 %v1332, %v1375
        %v1408 = vmul.f32 %v1334, %v1376
        %v1409 = vmul.f32 %v1336, %v1377
        %v1410 = vmul.f32 %v1338, %v1378
        %v1411 = vmul.f32 %v1340, %v1379
        %v1412 = vmul.f32 %v1342, %v1380
        %v1413 = vmul.f32 %v1344, %v1381
        %v1414 = vmul.f32 %v1346, %v1382
        %v1415 = vmul.f32 %v1348, %v1383
        %v1416 = vmul.f32 %v1350, %v1384
        %v1417 = vmul.f32 %v1352, %v1385
        %v1418 = vmul.f32 %v1354, %v1386
        %v1419 = vadd.f32 %v868, %v1387
        %v1420 = vadd.f32 %v873, %v1388
        %v1421 = vadd.f32 %v878, %v1389
        %v1422 = vadd.f32 %v883, %v1390
        %v1423 = vadd.f32 %v888, %v1391
        %v1424 = vadd.f32 %v893, %v1392
        %v1425 = vadd.f32 %v898, %v1393
        %v1426 = vadd.f32 %v903, %v1394
        %v1427 = vadd.f32 %v908, %v1395
        %v1428 = vadd.f32 %v913, %v1396
        %v1429 = vadd.f32 %v918, %v1397
        %v1430 = vadd.f32 %v923, %v1398
        %v1431 = vadd.f32 %v928, %v1399
        %v1432 = vadd.f32 %v933, %v1400
        %v1433 = vadd.f32 %v938, %v1401
        %v1434 = vadd.f32 %v943, %v1402
        %v1435 = vadd.f32 %v948, %v1403
        %v1436 = vadd.f32 %v953, %v1404
        %v1437 = vadd.f32 %v958, %v1405
        %v1438 = vadd.f32 %v963, %v1406
        %v1439 = vadd.f32 %v968, %v1407
        %v1440 = vadd.f32 %v973, %v1408
        %v1441 = vadd.f32 %v978, %v1409
        %v1442 = vadd.f32 %v983, %v1410
        %v1443 = vadd.f32 %v988, %v1411
        %v1444 = vadd.f32 %v993, %v1412
        %v1445 = vadd.f32 %v998, %v1413
        %v1446 = vadd.f32 %v1003, %v1414
        %v1447 = vadd.f32 %v1008, %v1415
        %v1448 = vadd.f32 %v1013, %v1416
        %v1449 = vadd.f32 %v1018, %v1417
        %v1450 = vadd.f32 %v1023, %v1418
        %v1451 = vld [vmem:[%s5] sm:$0xff]
        %v1452 = vld [vmem:[%s5 + $0x8] sm:$0x1]
        %vm1453 = vcmask 72704
        %v1455 = vsel %vm1453, %v1419, 0
        %v1458 = vsel %vm1453, %v1420, 0
        %v1461 = vsel %vm1453, %v1421, 0
        %v1464 = vsel %vm1453, %v1422, 0
        %v1467 = vsel %vm1453, %v1423, 0
        %v1470 = vsel %vm1453, %v1424, 0
        %v1473 = vsel %vm1453, %v1425, 0
        %v1476 = vsel %vm1453, %v1426, 0
        %v1479 = vsel %vm1453, %v1427, 0
        %v1482 = vsel %vm1453, %v1428, 0
        %v1485 = vsel %vm1453, %v1429, 0
        %v1488 = vsel %vm1453, %v1430, 0
        %v1491 = vsel %vm1453, %v1431, 0
        %v1494 = vsel %vm1453, %v1432, 0
        %v1497 = vsel %vm1453, %v1433, 0
        %v1500 = vsel %vm1453, %v1434, 0
        %v1503 = vsel %vm1453, %v1435, 0
        %v1506 = vsel %vm1453, %v1436, 0
        %v1509 = vsel %vm1453, %v1437, 0
        %v1512 = vsel %vm1453, %v1438, 0
        %v1515 = vsel %vm1453, %v1439, 0
        %v1518 = vsel %vm1453, %v1440, 0
        %v1521 = vsel %vm1453, %v1441, 0
        %v1524 = vsel %vm1453, %v1442, 0
        %v1527 = vsel %vm1453, %v1443, 0
        %v1530 = vsel %vm1453, %v1444, 0
        %v1533 = vsel %vm1453, %v1445, 0
        %v1536 = vsel %vm1453, %v1446, 0
        %v1539 = vsel %vm1453, %v1447, 0
        %v1542 = vsel %vm1453, %v1448, 0
        %v1545 = vsel %vm1453, %v1449, 0
        %v1548 = vsel %vm1453, %v1450, 0
        %v1551 = vsel %vm436, %v1452, 0
        %1553 = vmatprep.subr.mxu0 0.0
        %1554 = vmatpush1.msra.mxu0 0.0
        %1555 = vmatprep.subr.mxu0 0.0
        %1556 = vmatpush1.msra.mxu0 0.0
        %1557 = vmatprep.subr.mxu0 0.0
        %1558 = vmatpush1.msra.mxu0 0.0
        %1559 = vmatprep.subr.mxu0 0.0
        %1560 = vmatpush1.msra.mxu0 0.0
        %1561 = vmatprep.subr.mxu0 0.0
        %1562 = vmatpush1.msra.mxu0 0.0
        %1563 = vmatprep.subr.mxu0 0.0
        %1564 = vmatpush1.msra.mxu0 0.0
        %1565 = vmatprep.subr.mxu0 0.0
        %1566 = vmatpush1.msra.mxu0 0.0
        %1567 = vmatprep.subr.mxu0 0.0
        %1568 = vmatpush1.msra.mxu0 0.0
        %1569 = vmatprep.subr.mxu0 0.0
        %1570 = vmatpush1.msra.mxu0 0.0
        %1571 = vmatprep.subr.mxu0 0.0
        %1572 = vmatpush1.msra.mxu0 0.0
        %1573 = vmatprep.subr.mxu0 0.0
        %1574 = vmatpush1.msra.mxu0 0.0
        %1575 = vmatprep.subr.mxu0 0.0
        %1576 = vmatpush1.msra.mxu0 0.0
        %1577 = vmatprep.subr.mxu0 0.0
        %1578 = vmatpush1.msra.mxu0 0.0
        %1579 = vmatprep.subr.mxu0 0.0
        %1580 = vmatpush1.msra.mxu0 0.0
        %1581 = vmatprep.subr.mxu0 0.0
        %1582 = vmatpush1.msra.mxu0 %v1551
        %1583 = vmatprep.subr.mxu0 0.0
        %1584 = vmatpush1.msra.mxu0 %v1451
        %1585 = vmatprep.subr.mxu0 0.0
        %1586 = vmatpush2.msra.mxu0 0.0
        %1587 = vmatprep.subr.mxu0 0.0
        %1588 = vmatpush2.msra.mxu0 0.0
        %1589 = vmatprep.subr.mxu0 0.0
        %1590 = vmatpush2.msra.mxu0 0.0
        %1591 = vmatprep.subr.mxu0 0.0
        %1592 = vmatpush2.msra.mxu0 0.0
        %1593 = vmatprep.subr.mxu0 0.0
        %1594 = vmatpush2.msra.mxu0 0.0
        %1595 = vmatprep.subr.mxu0 0.0
        %1596 = vmatpush2.msra.mxu0 0.0
        %1597 = vmatprep.subr.mxu0 0.0
        %1598 = vmatpush2.msra.mxu0 0.0
        %1599 = vmatprep.subr.mxu0 0.0
        %1600 = vmatpush2.msra.mxu0 0.0
        %1601 = vmatprep.subr.mxu0 0.0
        %1602 = vmatpush2.msra.mxu0 0.0
        %1603 = vmatprep.subr.mxu0 0.0
        %1604 = vmatpush2.msra.mxu0 0.0
        %1605 = vmatprep.subr.mxu0 0.0
        %1606 = vmatpush2.msra.mxu0 0.0
        %1607 = vmatprep.subr.mxu0 0.0
        %1608 = vmatpush2.msra.mxu0 0.0
        %1609 = vmatprep.subr.mxu0 0.0
        %1610 = vmatpush2.msra.mxu0 0.0
        %1611 = vmatprep.subr.mxu0 0.0
        %1612 = vmatpush2.msra.mxu0 0.0
        %1613 = vmatprep.subr.mxu0 0.0
        %1614 = vmatpush2.msra.mxu0 0.0
        %1615 = vmatprep.subr.mxu0 0.0
        %1616 = vmatpush2.msra.mxu0 0.0
        %1617 = vmatprep.mubr.f32.mxu0 0.0
        %1618 = vmatmul.mubr.f32.gmra.mxu0 %v1455
        %v1619 = vpop.f32.mrf.mxu0
        %v1620 = vadd.f32 0.0, %v1619
        %v1621 = vpop.f32.mrf.mxu0
        %1622 = vmatprep.mubr.f32.mxu0 0.0
        %1623 = vmatmul.mubr.f32.gmra.mxu0 %v1458
        %v1624 = vpop.f32.mrf.mxu0
        %v1625 = vadd.f32 0.0, %v1624
        %v1626 = vpop.f32.mrf.mxu0
        %1627 = vmatprep.mubr.f32.mxu0 0.0
        %1628 = vmatmul.mubr.f32.gmra.mxu0 %v1461
        %v1629 = vpop.f32.mrf.mxu0
        %v1630 = vadd.f32 0.0, %v1629
        %v1631 = vpop.f32.mrf.mxu0
        %1632 = vmatprep.mubr.f32.mxu0 0.0
        %1633 = vmatmul.mubr.f32.gmra.mxu0 %v1464
        %v1634 = vpop.f32.mrf.mxu0
        %v1635 = vadd.f32 0.0, %v1634
        %v1636 = vpop.f32.mrf.mxu0
        %1637 = vmatprep.mubr.f32.mxu0 0.0
        %1638 = vmatmul.mubr.f32.gmra.mxu0 %v1467
        %v1639 = vpop.f32.mrf.mxu0
        %v1640 = vadd.f32 0.0, %v1639
        %v1641 = vpop.f32.mrf.mxu0
        %1642 = vmatprep.mubr.f32.mxu0 0.0
        %1643 = vmatmul.mubr.f32.gmra.mxu0 %v1470
        %v1644 = vpop.f32.mrf.mxu0
        %v1645 = vadd.f32 0.0, %v1644
        %v1646 = vpop.f32.mrf.mxu0
        %1647 = vmatprep.mubr.f32.mxu0 0.0
        %1648 = vmatmul.mubr.f32.gmra.mxu0 %v1473
        %v1649 = vpop.f32.mrf.mxu0
        %v1650 = vadd.f32 0.0, %v1649
        %v1651 = vpop.f32.mrf.mxu0
        %1652 = vmatprep.mubr.f32.mxu0 0.0
        %1653 = vmatmul.mubr.f32.gmra.mxu0 %v1476
        %v1654 = vpop.f32.mrf.mxu0
        %v1655 = vadd.f32 0.0, %v1654
        %v1656 = vpop.f32.mrf.mxu0
        %1657 = vmatprep.mubr.f32.mxu0 0.0
        %1658 = vmatmul.mubr.f32.gmra.mxu0 %v1479
        %v1659 = vpop.f32.mrf.mxu0
        %v1660 = vadd.f32 0.0, %v1659
        %v1661 = vpop.f32.mrf.mxu0
        %1662 = vmatprep.mubr.f32.mxu0 0.0
        %1663 = vmatmul.mubr.f32.gmra.mxu0 %v1482
        %v1664 = vpop.f32.mrf.mxu0
        %v1665 = vadd.f32 0.0, %v1664
        %v1666 = vpop.f32.mrf.mxu0
        %1667 = vmatprep.mubr.f32.mxu0 0.0
        %1668 = vmatmul.mubr.f32.gmra.mxu0 %v1485
        %v1669 = vpop.f32.mrf.mxu0
        %v1670 = vadd.f32 0.0, %v1669
        %v1671 = vpop.f32.mrf.mxu0
        %1672 = vmatprep.mubr.f32.mxu0 0.0
        %1673 = vmatmul.mubr.f32.gmra.mxu0 %v1488
        %v1674 = vpop.f32.mrf.mxu0
        %v1675 = vadd.f32 0.0, %v1674
        %v1676 = vpop.f32.mrf.mxu0
        %1677 = vmatprep.mubr.f32.mxu0 0.0
        %1678 = vmatmul.mubr.f32.gmra.mxu0 %v1491
        %v1679 = vpop.f32.mrf.mxu0
        %v1680 = vadd.f32 0.0, %v1679
        %v1681 = vpop.f32.mrf.mxu0
        %1682 = vmatprep.mubr.f32.mxu0 0.0
        %1683 = vmatmul.mubr.f32.gmra.mxu0 %v1494
        %v1684 = vpop.f32.mrf.mxu0
        %v1685 = vadd.f32 0.0, %v1684
        %v1686 = vpop.f32.mrf.mxu0
        %1687 = vmatprep.mubr.f32.mxu0 0.0
        %1688 = vmatmul.mubr.f32.gmra.mxu0 %v1497
        %v1689 = vpop.f32.mrf.mxu0
        %v1690 = vadd.f32 0.0, %v1689
        %v1691 = vpop.f32.mrf.mxu0
        %1692 = vmatprep.mubr.f32.mxu0 0.0
        %1693 = vmatmul.mubr.f32.gmra.mxu0 %v1500
        %v1694 = vpop.f32.mrf.mxu0
        %v1695 = vadd.f32 0.0, %v1694
        %v1696 = vpop.f32.mrf.mxu0
        %1697 = vmatprep.mubr.f32.mxu0 0.0
        %1698 = vmatmul.mubr.f32.gmra.mxu0 %v1503
        %v1699 = vpop.f32.mrf.mxu0
        %v1700 = vadd.f32 0.0, %v1699
        %v1701 = vpop.f32.mrf.mxu0
        %1702 = vmatprep.mubr.f32.mxu0 0.0
        %1703 = vmatmul.mubr.f32.gmra.mxu0 %v1506
        %v1704 = vpop.f32.mrf.mxu0
        %v1705 = vadd.f32 0.0, %v1704
        %v1706 = vpop.f32.mrf.mxu0
        %1707 = vmatprep.mubr.f32.mxu0 0.0
        %1708 = vmatmul.mubr.f32.gmra.mxu0 %v1509
        %v1709 = vpop.f32.mrf.mxu0
        %v1710 = vadd.f32 0.0, %v1709
        %v1711 = vpop.f32.mrf.mxu0
        %1712 = vmatprep.mubr.f32.mxu0 0.0
        %1713 = vmatmul.mubr.f32.gmra.mxu0 %v1512
        %v1714 = vpop.f32.mrf.mxu0
        %v1715 = vadd.f32 0.0, %v1714
        %v1716 = vpop.f32.mrf.mxu0
        %1717 = vmatprep.mubr.f32.mxu0 0.0
        %1718 = vmatmul.mubr.f32.gmra.mxu0 %v1515
        %v1719 = vpop.f32.mrf.mxu0
        %v1720 = vadd.f32 0.0, %v1719
        %v1721 = vpop.f32.mrf.mxu0
        %1722 = vmatprep.mubr.f32.mxu0 0.0
        %1723 = vmatmul.mubr.f32.gmra.mxu0 %v1518
        %v1724 = vpop.f32.mrf.mxu0
        %v1725 = vadd.f32 0.0, %v1724
        %v1726 = vpop.f32.mrf.mxu0
        %1727 = vmatprep.mubr.f32.mxu0 0.0
        %1728 = vmatmul.mubr.f32.gmra.mxu0 %v1521
        %v1729 = vpop.f32.mrf.mxu0
        %v1730 = vadd.f32 0.0, %v1729
        %v1731 = vpop.f32.mrf.mxu0
        %1732 = vmatprep.mubr.f32.mxu0 0.0
        %1733 = vmatmul.mubr.f32.gmra.mxu0 %v1524
        %v1734 = vpop.f32.mrf.mxu0
        %v1735 = vadd.f32 0.0, %v1734
        %v1736 = vpop.f32.mrf.mxu0
        %1737 = vmatprep.mubr.f32.mxu0 0.0
        %1738 = vmatmul.mubr.f32.gmra.mxu0 %v1527
        %v1739 = vpop.f32.mrf.mxu0
        %v1740 = vadd.f32 0.0, %v1739
        %v1741 = vpop.f32.mrf.mxu0
        %1742 = vmatprep.mubr.f32.mxu0 0.0
        %1743 = vmatmul.mubr.f32.gmra.mxu0 %v1530
        %v1744 = vpop.f32.mrf.mxu0
        %v1745 = vadd.f32 0.0, %v1744
        %v1746 = vpop.f32.mrf.mxu0
        %1747 = vmatprep.mubr.f32.mxu0 0.0
        %1748 = vmatmul.mubr.f32.gmra.mxu0 %v1533
        %v1749 = vpop.f32.mrf.mxu0
        %v1750 = vadd.f32 0.0, %v1749
        %v1751 = vpop.f32.mrf.mxu0
        %1752 = vmatprep.mubr.f32.mxu0 0.0
        %1753 = vmatmul.mubr.f32.gmra.mxu0 %v1536
        %v1754 = vpop.f32.mrf.mxu0
        %v1755 = vadd.f32 0.0, %v1754
        %v1756 = vpop.f32.mrf.mxu0
        %1757 = vmatprep.mubr.f32.mxu0 0.0
        %1758 = vmatmul.mubr.f32.gmra.mxu0 %v1539
        %v1759 = vpop.f32.mrf.mxu0
        %v1760 = vadd.f32 0.0, %v1759
        %v1761 = vpop.f32.mrf.mxu0
        %1762 = vmatprep.mubr.f32.mxu0 0.0
        %1763 = vmatmul.mubr.f32.gmra.mxu0 %v1542
        %v1764 = vpop.f32.mrf.mxu0
        %v1765 = vadd.f32 0.0, %v1764
        %v1766 = vpop.f32.mrf.mxu0
        %1767 = vmatprep.mubr.f32.mxu0 0.0
        %1768 = vmatmul.mubr.f32.gmra.mxu0 %v1545
        %v1769 = vpop.f32.mrf.mxu0
        %v1770 = vadd.f32 0.0, %v1769
        %v1771 = vpop.f32.mrf.mxu0
        %1772 = vmatprep.mubr.f32.mxu0 0.0
        %1773 = vmatmul.mubr.f32.gmra.mxu0 %v1548
        %v1774 = vpop.f32.mrf.mxu0
        %v1775 = vadd.f32 0.0, %v1774
        %v1776 = vpop.f32.mrf.mxu0
        %1777 = vdwg.mxu0
        %v1778 = vmax.f32 %v1620, 0.0
        %v1779 = vmax.f32 %v1625, 0.0
        %v1780 = vmax.f32 %v1630, 0.0
        %v1781 = vmax.f32 %v1635, 0.0
        %v1782 = vmax.f32 %v1640, 0.0
        %v1783 = vmax.f32 %v1645, 0.0
        %v1784 = vmax.f32 %v1650, 0.0
        %v1785 = vmax.f32 %v1655, 0.0
        %v1786 = vmax.f32 %v1660, 0.0
        %v1787 = vmax.f32 %v1665, 0.0
        %v1788 = vmax.f32 %v1670, 0.0
        %v1789 = vmax.f32 %v1675, 0.0
        %v1790 = vmax.f32 %v1680, 0.0
        %v1791 = vmax.f32 %v1685, 0.0
        %v1792 = vmax.f32 %v1690, 0.0
        %v1793 = vmax.f32 %v1695, 0.0
        %v1794 = vmax.f32 %v1700, 0.0
        %v1795 = vmax.f32 %v1705, 0.0
        %v1796 = vmax.f32 %v1710, 0.0
        %v1797 = vmax.f32 %v1715, 0.0
        %v1798 = vmax.f32 %v1720, 0.0
        %v1799 = vmax.f32 %v1725, 0.0
        %v1800 = vmax.f32 %v1730, 0.0
        %v1801 = vmax.f32 %v1735, 0.0
        %v1802 = vmax.f32 %v1740, 0.0
        %v1803 = vmax.f32 %v1745, 0.0
        %v1804 = vmax.f32 %v1750, 0.0
        %v1805 = vmax.f32 %v1755, 0.0
        %v1806 = vmax.f32 %v1760, 0.0
        %v1807 = vmax.f32 %v1765, 0.0
        %v1808 = vmax.f32 %v1770, 0.0
        %v1809 = vmax.f32 %v1775, 0.0
        %v1810 = vld [vmem:[%s6] sm:$0xff]
        %v1811 = vld [vmem:[%s6 + $0x8] sm:$0xff]
        %v1812 = vld [vmem:[%s6 + $0x10] sm:$0xff]
        %v1813 = vld [vmem:[%s6 + $0x18] sm:$0xff]
        %v1814 = vld [vmem:[%s6 + $0x20] sm:$0x1]
        %v1816 = vsel %vm339, %v1778, 0
        %v1819 = vsel %vm339, %v1779, 0
        %v1822 = vsel %vm339, %v1780, 0
        %v1825 = vsel %vm339, %v1781, 0
        %v1828 = vsel %vm339, %v1782, 0
        %v1831 = vsel %vm339, %v1783, 0
        %v1834 = vsel %vm339, %v1784, 0
        %v1837 = vsel %vm339, %v1785, 0
        %v1840 = vsel %vm339, %v1786, 0
        %v1843 = vsel %vm339, %v1787, 0
        %v1846 = vsel %vm339, %v1788, 0
        %v1849 = vsel %vm339, %v1789, 0
        %v1852 = vsel %vm339, %v1790, 0
        %v1855 = vsel %vm339, %v1791, 0
        %v1858 = vsel %vm339, %v1792, 0
        %v1861 = vsel %vm339, %v1793, 0
        %v1864 = vsel %vm339, %v1794, 0
        %v1867 = vsel %vm339, %v1795, 0
        %v1870 = vsel %vm339, %v1796, 0
        %v1873 = vsel %vm339, %v1797, 0
        %v1876 = vsel %vm339, %v1798, 0
        %v1879 = vsel %vm339, %v1799, 0
        %v1882 = vsel %vm339, %v1800, 0
        %v1885 = vsel %vm339, %v1801, 0
        %v1888 = vsel %vm339, %v1802, 0
        %v1891 = vsel %vm339, %v1803, 0
        %v1894 = vsel %vm339, %v1804, 0
        %v1897 = vsel %vm339, %v1805, 0
        %v1900 = vsel %vm339, %v1806, 0
        %v1903 = vsel %vm339, %v1807, 0
        %v1906 = vsel %vm339, %v1808, 0
        %v1909 = vsel %vm339, %v1809, 0
        %v1912 = vsel %vm436, %v1814, 0
        %1914 = vmatprep.subr.mxu0 0.0
        %1915 = vmatpush1.msra.mxu0 0.0
        %1916 = vmatprep.subr.mxu0 0.0
        %1917 = vmatpush1.msra.mxu0 0.0
        %1918 = vmatprep.subr.mxu0 0.0
        %1919 = vmatpush1.msra.mxu0 0.0
        %1920 = vmatprep.subr.mxu0 0.0
        %1921 = vmatpush1.msra.mxu0 0.0
        %1922 = vmatprep.subr.mxu0 0.0
        %1923 = vmatpush1.msra.mxu0 0.0
        %1924 = vmatprep.subr.mxu0 0.0
        %1925 = vmatpush1.msra.mxu0 0.0
        %1926 = vmatprep.subr.mxu0 0.0
        %1927 = vmatpush1.msra.mxu0 0.0
        %1928 = vmatprep.subr.mxu0 0.0
        %1929 = vmatpush1.msra.mxu0 0.0
        %1930 = vmatprep.subr.mxu0 0.0
        %1931 = vmatpush1.msra.mxu0 0.0
        %1932 = vmatprep.subr.mxu0 0.0
        %1933 = vmatpush1.msra.mxu0 0.0
        %1934 = vmatprep.subr.mxu0 0.0
        %1935 = vmatpush1.msra.mxu0 0.0
        %1936 = vmatprep.subr.mxu0 0.0
        %1937 = vmatpush1.msra.mxu0 %v1912
        %1938 = vmatprep.subr.mxu0 0.0
        %1939 = vmatpush1.msra.mxu0 %v1813
        %1940 = vmatprep.subr.mxu0 0.0
        %1941 = vmatpush1.msra.mxu0 %v1812
        %1942 = vmatprep.subr.mxu0 0.0
        %1943 = vmatpush1.msra.mxu0 %v1811
        %1944 = vmatprep.subr.mxu0 0.0
        %1945 = vmatpush1.msra.mxu0 %v1810
        %1946 = vmatprep.subr.mxu0 0.0
        %1947 = vmatpush2.msra.mxu0 0.0
        %1948 = vmatprep.subr.mxu0 0.0
        %1949 = vmatpush2.msra.mxu0 0.0
        %1950 = vmatprep.subr.mxu0 0.0
        %1951 = vmatpush2.msra.mxu0 0.0
        %1952 = vmatprep.subr.mxu0 0.0
        %1953 = vmatpush2.msra.mxu0 0.0
        %1954 = vmatprep.subr.mxu0 0.0
        %1955 = vmatpush2.msra.mxu0 0.0
        %1956 = vmatprep.subr.mxu0 0.0
        %1957 = vmatpush2.msra.mxu0 0.0
        %1958 = vmatprep.subr.mxu0 0.0
        %1959 = vmatpush2.msra.mxu0 0.0
        %1960 = vmatprep.subr.mxu0 0.0
        %1961 = vmatpush2.msra.mxu0 0.0
        %1962 = vmatprep.subr.mxu0 0.0
        %1963 = vmatpush2.msra.mxu0 0.0
        %1964 = vmatprep.subr.mxu0 0.0
        %1965 = vmatpush2.msra.mxu0 0.0
        %1966 = vmatprep.subr.mxu0 0.0
        %1967 = vmatpush2.msra.mxu0 0.0
        %1968 = vmatprep.subr.mxu0 0.0
        %1969 = vmatpush2.msra.mxu0 0.0
        %1970 = vmatprep.subr.mxu0 0.0
        %1971 = vmatpush2.msra.mxu0 0.0
        %1972 = vmatprep.subr.mxu0 0.0
        %1973 = vmatpush2.msra.mxu0 0.0
        %1974 = vmatprep.subr.mxu0 0.0
        %1975 = vmatpush2.msra.mxu0 0.0
        %1976 = vmatprep.subr.mxu0 0.0
        %1977 = vmatpush2.msra.mxu0 0.0
        %1978 = vmatprep.mubr.f32.mxu0 0.0
        %1979 = vmatmul.mubr.f32.gmra.mxu0 %v1816
        %v1980 = vpop.f32.mrf.mxu0
        %v1981 = vadd.f32 0.0, %v1980
        %v1982 = vpop.f32.mrf.mxu0
        %1983 = vmatprep.mubr.f32.mxu0 0.0
        %1984 = vmatmul.mubr.f32.gmra.mxu0 %v1819
        %v1985 = vpop.f32.mrf.mxu0
        %v1986 = vadd.f32 0.0, %v1985
        %v1987 = vpop.f32.mrf.mxu0
        %1988 = vmatprep.mubr.f32.mxu0 0.0
        %1989 = vmatmul.mubr.f32.gmra.mxu0 %v1822
        %v1990 = vpop.f32.mrf.mxu0
        %v1991 = vadd.f32 0.0, %v1990
        %v1992 = vpop.f32.mrf.mxu0
        %1993 = vmatprep.mubr.f32.mxu0 0.0
        %1994 = vmatmul.mubr.f32.gmra.mxu0 %v1825
        %v1995 = vpop.f32.mrf.mxu0
        %v1996 = vadd.f32 0.0, %v1995
        %v1997 = vpop.f32.mrf.mxu0
        %1998 = vmatprep.mubr.f32.mxu0 0.0
        %1999 = vmatmul.mubr.f32.gmra.mxu0 %v1828
        %v2000 = vpop.f32.mrf.mxu0
        %v2001 = vadd.f32 0.0, %v2000
        %v2002 = vpop.f32.mrf.mxu0
        %2003 = vmatprep.mubr.f32.mxu0 0.0
        %2004 = vmatmul.mubr.f32.gmra.mxu0 %v1831
        %v2005 = vpop.f32.mrf.mxu0
        %v2006 = vadd.f32 0.0, %v2005
        %v2007 = vpop.f32.mrf.mxu0
        %2008 = vmatprep.mubr.f32.mxu0 0.0
        %2009 = vmatmul.mubr.f32.gmra.mxu0 %v1834
        %v2010 = vpop.f32.mrf.mxu0
        %v2011 = vadd.f32 0.0, %v2010
        %v2012 = vpop.f32.mrf.mxu0
        %2013 = vmatprep.mubr.f32.mxu0 0.0
        %2014 = vmatmul.mubr.f32.gmra.mxu0 %v1837
        %v2015 = vpop.f32.mrf.mxu0
        %v2016 = vadd.f32 0.0, %v2015
        %v2017 = vpop.f32.mrf.mxu0
        %2018 = vmatprep.mubr.f32.mxu0 0.0
        %2019 = vmatmul.mubr.f32.gmra.mxu0 %v1840
        %v2020 = vpop.f32.mrf.mxu0
        %v2021 = vadd.f32 0.0, %v2020
        %v2022 = vpop.f32.mrf.mxu0
        %2023 = vmatprep.mubr.f32.mxu0 0.0
        %2024 = vmatmul.mubr.f32.gmra.mxu0 %v1843
        %v2025 = vpop.f32.mrf.mxu0
        %v2026 = vadd.f32 0.0, %v2025
        %v2027 = vpop.f32.mrf.mxu0
        %2028 = vmatprep.mubr.f32.mxu0 0.0
        %2029 = vmatmul.mubr.f32.gmra.mxu0 %v1846
        %v2030 = vpop.f32.mrf.mxu0
        %v2031 = vadd.f32 0.0, %v2030
        %v2032 = vpop.f32.mrf.mxu0
        %2033 = vmatprep.mubr.f32.mxu0 0.0
        %2034 = vmatmul.mubr.f32.gmra.mxu0 %v1849
        %v2035 = vpop.f32.mrf.mxu0
        %v2036 = vadd.f32 0.0, %v2035
        %v2037 = vpop.f32.mrf.mxu0
        %2038 = vmatprep.mubr.f32.mxu0 0.0
        %2039 = vmatmul.mubr.f32.gmra.mxu0 %v1852
        %v2040 = vpop.f32.mrf.mxu0
        %v2041 = vadd.f32 0.0, %v2040
        %v2042 = vpop.f32.mrf.mxu0
        %2043 = vmatprep.mubr.f32.mxu0 0.0
        %2044 = vmatmul.mubr.f32.gmra.mxu0 %v1855
        %v2045 = vpop.f32.mrf.mxu0
        %v2046 = vadd.f32 0.0, %v2045
        %v2047 = vpop.f32.mrf.mxu0
        %2048 = vmatprep.mubr.f32.mxu0 0.0
        %2049 = vmatmul.mubr.f32.gmra.mxu0 %v1858
        %v2050 = vpop.f32.mrf.mxu0
        %v2051 = vadd.f32 0.0, %v2050
        %v2052 = vpop.f32.mrf.mxu0
        %2053 = vmatprep.mubr.f32.mxu0 0.0
        %2054 = vmatmul.mubr.f32.gmra.mxu0 %v1861
        %v2055 = vpop.f32.mrf.mxu0
        %v2056 = vadd.f32 0.0, %v2055
        %v2057 = vpop.f32.mrf.mxu0
        %2058 = vmatprep.mubr.f32.mxu0 0.0
        %2059 = vmatmul.mubr.f32.gmra.mxu0 %v1864
        %v2060 = vpop.f32.mrf.mxu0
        %v2061 = vadd.f32 0.0, %v2060
        %v2062 = vpop.f32.mrf.mxu0
        %2063 = vmatprep.mubr.f32.mxu0 0.0
        %2064 = vmatmul.mubr.f32.gmra.mxu0 %v1867
        %v2065 = vpop.f32.mrf.mxu0
        %v2066 = vadd.f32 0.0, %v2065
        %v2067 = vpop.f32.mrf.mxu0
        %2068 = vmatprep.mubr.f32.mxu0 0.0
        %2069 = vmatmul.mubr.f32.gmra.mxu0 %v1870
        %v2070 = vpop.f32.mrf.mxu0
        %v2071 = vadd.f32 0.0, %v2070
        %v2072 = vpop.f32.mrf.mxu0
        %2073 = vmatprep.mubr.f32.mxu0 0.0
        %2074 = vmatmul.mubr.f32.gmra.mxu0 %v1873
        %v2075 = vpop.f32.mrf.mxu0
        %v2076 = vadd.f32 0.0, %v2075
        %v2077 = vpop.f32.mrf.mxu0
        %2078 = vmatprep.mubr.f32.mxu0 0.0
        %2079 = vmatmul.mubr.f32.gmra.mxu0 %v1876
        %v2080 = vpop.f32.mrf.mxu0
        %v2081 = vadd.f32 0.0, %v2080
        %v2082 = vpop.f32.mrf.mxu0
        %2083 = vmatprep.mubr.f32.mxu0 0.0
        %2084 = vmatmul.mubr.f32.gmra.mxu0 %v1879
        %v2085 = vpop.f32.mrf.mxu0
        %v2086 = vadd.f32 0.0, %v2085
        %v2087 = vpop.f32.mrf.mxu0
        %2088 = vmatprep.mubr.f32.mxu0 0.0
        %2089 = vmatmul.mubr.f32.gmra.mxu0 %v1882
        %v2090 = vpop.f32.mrf.mxu0
        %v2091 = vadd.f32 0.0, %v2090
        %v2092 = vpop.f32.mrf.mxu0
        %2093 = vmatprep.mubr.f32.mxu0 0.0
        %2094 = vmatmul.mubr.f32.gmra.mxu0 %v1885
        %v2095 = vpop.f32.mrf.mxu0
        %v2096 = vadd.f32 0.0, %v2095
        %v2097 = vpop.f32.mrf.mxu0
        %2098 = vmatprep.mubr.f32.mxu0 0.0
        %2099 = vmatmul.mubr.f32.gmra.mxu0 %v1888
        %v2100 = vpop.f32.mrf.mxu0
        %v2101 = vadd.f32 0.0, %v2100
        %v2102 = vpop.f32.mrf.mxu0
        %2103 = vmatprep.mubr.f32.mxu0 0.0
        %2104 = vmatmul.mubr.f32.gmra.mxu0 %v1891
        %v2105 = vpop.f32.mrf.mxu0
        %v2106 = vadd.f32 0.0, %v2105
        %v2107 = vpop.f32.mrf.mxu0
        %2108 = vmatprep.mubr.f32.mxu0 0.0
        %2109 = vmatmul.mubr.f32.gmra.mxu0 %v1894
        %v2110 = vpop.f32.mrf.mxu0
        %v2111 = vadd.f32 0.0, %v2110
        %v2112 = vpop.f32.mrf.mxu0
        %2113 = vmatprep.mubr.f32.mxu0 0.0
        %2114 = vmatmul.mubr.f32.gmra.mxu0 %v1897
        %v2115 = vpop.f32.mrf.mxu0
        %v2116 = vadd.f32 0.0, %v2115
        %v2117 = vpop.f32.mrf.mxu0
        %2118 = vmatprep.mubr.f32.mxu0 0.0
        %2119 = vmatmul.mubr.f32.gmra.mxu0 %v1900
        %v2120 = vpop.f32.mrf.mxu0
        %v2121 = vadd.f32 0.0, %v2120
        %v2122 = vpop.f32.mrf.mxu0
        %2123 = vmatprep.mubr.f32.mxu0 0.0
        %2124 = vmatmul.mubr.f32.gmra.mxu0 %v1903
        %v2125 = vpop.f32.mrf.mxu0
        %v2126 = vadd.f32 0.0, %v2125
        %v2127 = vpop.f32.mrf.mxu0
        %2128 = vmatprep.mubr.f32.mxu0 0.0
        %2129 = vmatmul.mubr.f32.gmra.mxu0 %v1906
        %v2130 = vpop.f32.mrf.mxu0
        %v2131 = vadd.f32 0.0, %v2130
        %v2132 = vpop.f32.mrf.mxu0
        %2133 = vmatprep.mubr.f32.mxu0 0.0
        %2134 = vmatmul.mubr.f32.gmra.mxu0 %v1909
        %v2135 = vpop.f32.mrf.mxu0
        %v2136 = vadd.f32 0.0, %v2135
        %v2137 = vpop.f32.mrf.mxu0
        %2138 = vdwg.mxu0
        %2139 = vrot.lane.b32.xlu0 %v1419, 48
        %v2140 = vpop.permute.xlu0 %2139
        %2141 = vrot.lane.b32.xlu0 %v1420, 48
        %v2142 = vpop.permute.xlu0 %2141
        %2143 = vrot.lane.b32.xlu0 %v1421, 48
        %v2144 = vpop.permute.xlu0 %2143
        %2145 = vrot.lane.b32.xlu0 %v1422, 48
        %v2146 = vpop.permute.xlu0 %2145
        %2147 = vrot.lane.b32.xlu0 %v1423, 48
        %v2148 = vpop.permute.xlu0 %2147
        %2149 = vrot.lane.b32.xlu0 %v1424, 48
        %v2150 = vpop.permute.xlu0 %2149
        %2151 = vrot.lane.b32.xlu0 %v1425, 48
        %v2152 = vpop.permute.xlu0 %2151
        %2153 = vrot.lane.b32.xlu0 %v1426, 48
        %v2154 = vpop.permute.xlu0 %2153
        %2155 = vrot.lane.b32.xlu0 %v1427, 48
        %v2156 = vpop.permute.xlu0 %2155
        %2157 = vrot.lane.b32.xlu0 %v1428, 48
        %v2158 = vpop.permute.xlu0 %2157
        %2159 = vrot.lane.b32.xlu0 %v1429, 48
        %v2160 = vpop.permute.xlu0 %2159
        %2161 = vrot.lane.b32.xlu0 %v1430, 48
        %v2162 = vpop.permute.xlu0 %2161
        %2163 = vrot.lane.b32.xlu0 %v1431, 48
        %v2164 = vpop.permute.xlu0 %2163
        %2165 = vrot.lane.b32.xlu0 %v1432, 48
        %v2166 = vpop.permute.xlu0 %2165
        %2167 = vrot.lane.b32.xlu0 %v1433, 48
        %v2168 = vpop.permute.xlu0 %2167
        %2169 = vrot.lane.b32.xlu0 %v1434, 48
        %v2170 = vpop.permute.xlu0 %2169
        %2171 = vrot.lane.b32.xlu0 %v1435, 48
        %v2172 = vpop.permute.xlu0 %2171
        %2173 = vrot.lane.b32.xlu0 %v1436, 48
        %v2174 = vpop.permute.xlu0 %2173
        %2175 = vrot.lane.b32.xlu0 %v1437, 48
        %v2176 = vpop.permute.xlu0 %2175
        %2177 = vrot.lane.b32.xlu0 %v1438, 48
        %v2178 = vpop.permute.xlu0 %2177
        %2179 = vrot.lane.b32.xlu0 %v1439, 48
        %v2180 = vpop.permute.xlu0 %2179
        %2181 = vrot.lane.b32.xlu0 %v1440, 48
        %v2182 = vpop.permute.xlu0 %2181
        %2183 = vrot.lane.b32.xlu0 %v1441, 48
        %v2184 = vpop.permute.xlu0 %2183
        %2185 = vrot.lane.b32.xlu0 %v1442, 48
        %v2186 = vpop.permute.xlu0 %2185
        %2187 = vrot.lane.b32.xlu0 %v1443, 48
        %v2188 = vpop.permute.xlu0 %2187
        %2189 = vrot.lane.b32.xlu0 %v1444, 48
        %v2190 = vpop.permute.xlu0 %2189
        %2191 = vrot.lane.b32.xlu0 %v1445, 48
        %v2192 = vpop.permute.xlu0 %2191
        %2193 = vrot.lane.b32.xlu0 %v1446, 48
        %v2194 = vpop.permute.xlu0 %2193
        %2195 = vrot.lane.b32.xlu0 %v1447, 48
        %v2196 = vpop.permute.xlu0 %2195
        %2197 = vrot.lane.b32.xlu0 %v1448, 48
        %v2198 = vpop.permute.xlu0 %2197
        %2199 = vrot.lane.b32.xlu0 %v1449, 48
        %v2200 = vpop.permute.xlu0 %2199
        %2201 = vrot.lane.b32.xlu0 %v1450, 48
        %v2202 = vpop.permute.xlu0 %2201
        %2267 = vrot.lane.b32.xlu0 %v868, 57
        %v2268 = vpop.permute.xlu0 %2267
        %2269 = vrot.lane.b32.xlu0 %v873, 57
        %v2270 = vpop.permute.xlu0 %2269
        %2271 = vrot.lane.b32.xlu0 %v878, 57
        %v2272 = vpop.permute.xlu0 %2271
        %2273 = vrot.lane.b32.xlu0 %v883, 57
        %v2274 = vpop.permute.xlu0 %2273
        %2275 = vrot.lane.b32.xlu0 %v888, 57
        %v2276 = vpop.permute.xlu0 %2275
        %2277 = vrot.lane.b32.xlu0 %v893, 57
        %v2278 = vpop.permute.xlu0 %2277
        %2279 = vrot.lane.b32.xlu0 %v898, 57
        %v2280 = vpop.permute.xlu0 %2279
        %2281 = vrot.lane.b32.xlu0 %v903, 57
        %v2282 = vpop.permute.xlu0 %2281
        %2283 = vrot.lane.b32.xlu0 %v908, 57
        %v2284 = vpop.permute.xlu0 %2283
        %2285 = vrot.lane.b32.xlu0 %v913, 57
        %v2286 = vpop.permute.xlu0 %2285
        %2287 = vrot.lane.b32.xlu0 %v918, 57
        %v2288 = vpop.permute.xlu0 %2287
        %2289 = vrot.lane.b32.xlu0 %v923, 57
        %v2290 = vpop.permute.xlu0 %2289
        %2291 = vrot.lane.b32.xlu0 %v928, 57
        %v2292 = vpop.permute.xlu0 %2291
        %2293 = vrot.lane.b32.xlu0 %v933, 57
        %v2294 = vpop.permute.xlu0 %2293
        %2295 = vrot.lane.b32.xlu0 %v938, 57
        %v2296 = vpop.permute.xlu0 %2295
        %2297 = vrot.lane.b32.xlu0 %v943, 57
        %v2298 = vpop.permute.xlu0 %2297
        %2299 = vrot.lane.b32.xlu0 %v948, 57
        %v2300 = vpop.permute.xlu0 %2299
        %2301 = vrot.lane.b32.xlu0 %v953, 57
        %v2302 = vpop.permute.xlu0 %2301
        %2303 = vrot.lane.b32.xlu0 %v958, 57
        %v2304 = vpop.permute.xlu0 %2303
        %2305 = vrot.lane.b32.xlu0 %v963, 57
        %v2306 = vpop.permute.xlu0 %2305
        %2307 = vrot.lane.b32.xlu0 %v968, 57
        %v2308 = vpop.permute.xlu0 %2307
        %2309 = vrot.lane.b32.xlu0 %v973, 57
        %v2310 = vpop.permute.xlu0 %2309
        %2311 = vrot.lane.b32.xlu0 %v978, 57
        %v2312 = vpop.permute.xlu0 %2311
        %2313 = vrot.lane.b32.xlu0 %v983, 57
        %v2314 = vpop.permute.xlu0 %2313
        %2315 = vrot.lane.b32.xlu0 %v988, 57
        %v2316 = vpop.permute.xlu0 %2315
        %2317 = vrot.lane.b32.xlu0 %v993, 57
        %v2318 = vpop.permute.xlu0 %2317
        %2319 = vrot.lane.b32.xlu0 %v998, 57
        %v2320 = vpop.permute.xlu0 %2319
        %2321 = vrot.lane.b32.xlu0 %v1003, 57
        %v2322 = vpop.permute.xlu0 %2321
        %2323 = vrot.lane.b32.xlu0 %v1008, 57
        %v2324 = vpop.permute.xlu0 %2323
        %2325 = vrot.lane.b32.xlu0 %v1013, 57
        %v2326 = vpop.permute.xlu0 %2325
        %2327 = vrot.lane.b32.xlu0 %v1018, 57
        %v2328 = vpop.permute.xlu0 %2327
        %2329 = vrot.lane.b32.xlu0 %v1023, 57
        %v2330 = vpop.permute.xlu0 %2329
        %2395 = vrot.lane.b32.xlu0 %v1292, 66
        %v2396 = vpop.permute.xlu0 %2395
        %2397 = vrot.lane.b32.xlu0 %v1294, 66
        %v2398 = vpop.permute.xlu0 %2397
        %2399 = vrot.lane.b32.xlu0 %v1296, 66
        %v2400 = vpop.permute.xlu0 %2399
        %2401 = vrot.lane.b32.xlu0 %v1298, 66
        %v2402 = vpop.permute.xlu0 %2401
        %2403 = vrot.lane.b32.xlu0 %v1300, 66
        %v2404 = vpop.permute.xlu0 %2403
        %2405 = vrot.lane.b32.xlu0 %v1302, 66
        %v2406 = vpop.permute.xlu0 %2405
        %2407 = vrot.lane.b32.xlu0 %v1304, 66
        %v2408 = vpop.permute.xlu0 %2407
        %2409 = vrot.lane.b32.xlu0 %v1306, 66
        %v2410 = vpop.permute.xlu0 %2409
        %2411 = vrot.lane.b32.xlu0 %v1308, 66
        %v2412 = vpop.permute.xlu0 %2411
        %2413 = vrot.lane.b32.xlu0 %v1310, 66
        %v2414 = vpop.permute.xlu0 %2413
        %2415 = vrot.lane.b32.xlu0 %v1312, 66
        %v2416 = vpop.permute.xlu0 %2415
        %2417 = vrot.lane.b32.xlu0 %v1314, 66
        %v2418 = vpop.permute.xlu0 %2417
        %2419 = vrot.lane.b32.xlu0 %v1316, 66
        %v2420 = vpop.permute.xlu0 %2419
        %2421 = vrot.lane.b32.xlu0 %v1318, 66
        %v2422 = vpop.permute.xlu0 %2421
        %2423 = vrot.lane.b32.xlu0 %v1320, 66
        %v2424 = vpop.permute.xlu0 %2423
        %2425 = vrot.lane.b32.xlu0 %v1322, 66
        %v2426 = vpop.permute.xlu0 %2425
        %2427 = vrot.lane.b32.xlu0 %v1324, 66
        %v2428 = vpop.permute.xlu0 %2427
        %2429 = vrot.lane.b32.xlu0 %v1326, 66
        %v2430 = vpop.permute.xlu0 %2429
        %2431 = vrot.lane.b32.xlu0 %v1328, 66
        %v2432 = vpop.permute.xlu0 %2431
        %2433 = vrot.lane.b32.xlu0 %v1330, 66
        %v2434 = vpop.permute.xlu0 %2433
        %2435 = vrot.lane.b32.xlu0 %v1332, 66
        %v2436 = vpop.permute.xlu0 %2435
        %2437 = vrot.lane.b32.xlu0 %v1334, 66
        %v2438 = vpop.permute.xlu0 %2437
        %2439 = vrot.lane.b32.xlu0 %v1336, 66
        %v2440 = vpop.permute.xlu0 %2439
        %2441 = vrot.lane.b32.xlu0 %v1338, 66
        %v2442 = vpop.permute.xlu0 %2441
        %2443 = vrot.lane.b32.xlu0 %v1340, 66
        %v2444 = vpop.permute.xlu0 %2443
        %2445 = vrot.lane.b32.xlu0 %v1342, 66
        %v2446 = vpop.permute.xlu0 %2445
        %2447 = vrot.lane.b32.xlu0 %v1344, 66
        %v2448 = vpop.permute.xlu0 %2447
        %2449 = vrot.lane.b32.xlu0 %v1346, 66
        %v2450 = vpop.permute.xlu0 %2449
        %2451 = vrot.lane.b32.xlu0 %v1348, 66
        %v2452 = vpop.permute.xlu0 %2451
        %2453 = vrot.lane.b32.xlu0 %v1350, 66
        %v2454 = vpop.permute.xlu0 %2453
        %2455 = vrot.lane.b32.xlu0 %v1352, 66
        %v2456 = vpop.permute.xlu0 %2455
        %2457 = vrot.lane.b32.xlu0 %v1354, 66
        %v2458 = vpop.permute.xlu0 %2457
        %vm2491 = vcmask 392192
        %v2492 = vsel %vm2491, %v1981, %v2140
        %v2493 = vsel %vm2491, %v1986, %v2142
        %v2494 = vsel %vm2491, %v1991, %v2144
        %v2495 = vsel %vm2491, %v1996, %v2146
        %v2496 = vsel %vm2491, %v2001, %v2148
        %v2497 = vsel %vm2491, %v2006, %v2150
        %v2498 = vsel %vm2491, %v2011, %v2152
        %v2499 = vsel %vm2491, %v2016, %v2154
        %v2500 = vsel %vm2491, %v2021, %v2156
        %v2501 = vsel %vm2491, %v2026, %v2158
        %v2502 = vsel %vm2491, %v2031, %v2160
        %v2503 = vsel %vm2491, %v2036, %v2162
        %v2504 = vsel %vm2491, %v2041, %v2164
        %v2505 = vsel %vm2491, %v2046, %v2166
        %v2506 = vsel %vm2491, %v2051, %v2168
        %v2507 = vsel %vm2491, %v2056, %v2170
        %v2508 = vsel %vm2491, %v2061, %v2172
        %v2509 = vsel %vm2491, %v2066, %v2174
        %v2510 = vsel %vm2491, %v2071, %v2176
        %v2511 = vsel %vm2491, %v2076, %v2178
        %v2512 = vsel %vm2491, %v2081, %v2180
        %v2513 = vsel %vm2491, %v2086, %v2182
        %v2514 = vsel %vm2491, %v2091, %v2184
        %v2515 = vsel %vm2491, %v2096, %v2186
        %v2516 = vsel %vm2491, %v2101, %v2188
        %v2517 = vsel %vm2491, %v2106, %v2190
        %v2518 = vsel %vm2491, %v2111, %v2192
        %v2519 = vsel %vm2491, %v2116, %v2194
        %v2520 = vsel %vm2491, %v2121, %v2196
        %v2521 = vsel %vm2491, %v2126, %v2198
        %v2522 = vsel %vm2491, %v2131, %v2200
        %v2523 = vsel %vm2491, %v2136, %v2202
        %vm2524 = vcmask 465920
        %v2525 = vsel %vm2524, %v2492, %v2268
        %v2526 = vsel %vm2524, %v2493, %v2270
        %v2527 = vsel %vm2524, %v2494, %v2272
        %v2528 = vsel %vm2524, %v2495, %v2274
        %v2529 = vsel %vm2524, %v2496, %v2276
        %v2530 = vsel %vm2524, %v2497, %v2278
        %v2531 = vsel %vm2524, %v2498, %v2280
        %v2532 = vsel %vm2524, %v2499, %v2282
        %v2533 = vsel %vm2524, %v2500, %v2284
        %v2534 = vsel %vm2524, %v2501, %v2286
        %v2535 = vsel %vm2524, %v2502, %v2288
        %v2536 = vsel %vm2524, %v2503, %v2290
        %v2537 = vsel %vm2524, %v2504, %v2292
        %v2538 = vsel %vm2524, %v2505, %v2294
        %v2539 = vsel %vm2524, %v2506, %v2296
        %v2540 = vsel %vm2524, %v2507, %v2298
        %v2541 = vsel %vm2524, %v2508, %v2300
        %v2542 = vsel %vm2524, %v2509, %v2302
        %v2543 = vsel %vm2524, %v2510, %v2304
        %v2544 = vsel %vm2524, %v2511, %v2306
        %v2545 = vsel %vm2524, %v2512, %v2308
        %v2546 = vsel %vm2524, %v2513, %v2310
        %v2547 = vsel %vm2524, %v2514, %v2312
        %v2548 = vsel %vm2524, %v2515, %v2314
        %v2549 = vsel %vm2524, %v2516, %v2316
        %v2550 = vsel %vm2524, %v2517, %v2318
        %v2551 = vsel %vm2524, %v2518, %v2320
        %v2552 = vsel %vm2524, %v2519, %v2322
        %v2553 = vsel %vm2524, %v2520, %v2324
        %v2554 = vsel %vm2524, %v2521, %v2326
        %v2555 = vsel %vm2524, %v2522, %v2328
        %v2556 = vsel %vm2524, %v2523, %v2330
        %vm2557 = vcmask 539648
        %v2558 = vsel %vm2557, %v2525, %v2396
        %v2559 = vsel %vm2557, %v2526, %v2398
        %v2560 = vsel %vm2557, %v2527, %v2400
        %v2561 = vsel %vm2557, %v2528, %v2402
        %v2562 = vsel %vm2557, %v2529, %v2404
        %v2563 = vsel %vm2557, %v2530, %v2406
        %v2564 = vsel %vm2557, %v2531, %v2408
        %v2565 = vsel %vm2557, %v2532, %v2410
        %v2566 = vsel %vm2557, %v2533, %v2412
        %v2567 = vsel %vm2557, %v2534, %v2414
        %v2568 = vsel %vm2557, %v2535, %v2416
        %v2569 = vsel %vm2557, %v2536, %v2418
        %v2570 = vsel %vm2557, %v2537, %v2420
        %v2571 = vsel %vm2557, %v2538, %v2422
        %v2572 = vsel %vm2557, %v2539, %v2424
        %v2573 = vsel %vm2557, %v2540, %v2426
        %v2574 = vsel %vm2557, %v2541, %v2428
        %v2575 = vsel %vm2557, %v2542, %v2430
        %v2576 = vsel %vm2557, %v2543, %v2432
        %v2577 = vsel %vm2557, %v2544, %v2434
        %v2578 = vsel %vm2557, %v2545, %v2436
        %v2579 = vsel %vm2557, %v2546, %v2438
        %v2580 = vsel %vm2557, %v2547, %v2440
        %v2581 = vsel %vm2557, %v2548, %v2442
        %v2582 = vsel %vm2557, %v2549, %v2444
        %v2583 = vsel %vm2557, %v2550, %v2446
        %v2584 = vsel %vm2557, %v2551, %v2448
        %v2585 = vsel %vm2557, %v2552, %v2450
        %v2586 = vsel %vm2557, %v2553, %v2452
        %v2587 = vsel %vm2557, %v2554, %v2454
        %v2588 = vsel %vm2557, %v2555, %v2456
        %v2589 = vsel %vm2557, %v2556, %v2458
        %vm2590 = vcmask 613376
        %v2591 = vsel %vm2590, %v2558, 0.0
        %v2592 = vsel %vm2590, %v2559, 0.0
        %v2593 = vsel %vm2590, %v2560, 0.0
        %v2594 = vsel %vm2590, %v2561, 0.0
        %v2595 = vsel %vm2590, %v2562, 0.0
        %v2596 = vsel %vm2590, %v2563, 0.0
        %v2597 = vsel %vm2590, %v2564, 0.0
        %v2598 = vsel %vm2590, %v2565, 0.0
        %v2599 = vsel %vm2590, %v2566, 0.0
        %v2600 = vsel %vm2590, %v2567, 0.0
        %v2601 = vsel %vm2590, %v2568, 0.0
        %v2602 = vsel %vm2590, %v2569, 0.0
        %v2603 = vsel %vm2590, %v2570, 0.0
        %v2604 = vsel %vm2590, %v2571, 0.0
        %v2605 = vsel %vm2590, %v2572, 0.0
        %v2606 = vsel %vm2590, %v2573, 0.0
        %v2607 = vsel %vm2590, %v2574, 0.0
        %v2608 = vsel %vm2590, %v2575, 0.0
        %v2609 = vsel %vm2590, %v2576, 0.0
        %v2610 = vsel %vm2590, %v2577, 0.0
        %v2611 = vsel %vm2590, %v2578, 0.0
        %v2612 = vsel %vm2590, %v2579, 0.0
        %v2613 = vsel %vm2590, %v2580, 0.0
        %v2614 = vsel %vm2590, %v2581, 0.0
        %v2615 = vsel %vm2590, %v2582, 0.0
        %v2616 = vsel %vm2590, %v2583, 0.0
        %v2617 = vsel %vm2590, %v2584, 0.0
        %v2618 = vsel %vm2590, %v2585, 0.0
        %v2619 = vsel %vm2590, %v2586, 0.0
        %v2620 = vsel %vm2590, %v2587, 0.0
        %v2621 = vsel %vm2590, %v2588, 0.0
        %v2622 = vsel %vm2590, %v2589, 0.0
        %2623 = vst [vmem:[%s288] sm:$0xff] %v2591
        %2624 = vst [vmem:[%s288 + $0x8] sm:$0xff] %v2592
        %2625 = vst [vmem:[%s288 + $0x10] sm:$0xff] %v2593
        %2626 = vst [vmem:[%s288 + $0x18] sm:$0xff] %v2594
        %2627 = vst [vmem:[%s288 + $0x20] sm:$0xff] %v2595
        %2628 = vst [vmem:[%s288 + $0x28] sm:$0xff] %v2596
        %2629 = vst [vmem:[%s288 + $0x30] sm:$0xff] %v2597
        %2630 = vst [vmem:[%s288 + $0x38] sm:$0xff] %v2598
        %2631 = vst [vmem:[%s288 + $0x40] sm:$0xff] %v2599
        %2632 = vst [vmem:[%s288 + $0x48] sm:$0xff] %v2600
        %2633 = vst [vmem:[%s288 + $0x50] sm:$0xff] %v2601
        %2634 = vst [vmem:[%s288 + $0x58] sm:$0xff] %v2602
        %2635 = vst [vmem:[%s288 + $0x60] sm:$0xff] %v2603
        %2636 = vst [vmem:[%s288 + $0x68] sm:$0xff] %v2604
        %2637 = vst [vmem:[%s288 + $0x70] sm:$0xff] %v2605
        %2638 = vst [vmem:[%s288 + $0x78] sm:$0xff] %v2606
        %2639 = vst [vmem:[%s288 + $0x80] sm:$0xff] %v2607
        %2640 = vst [vmem:[%s288 + $0x88] sm:$0xff] %v2608
        %2641 = vst [vmem:[%s288 + $0x90] sm:$0xff] %v2609
        %2642 = vst [vmem:[%s288 + $0x98] sm:$0xff] %v2610
        %2643 = vst [vmem:[%s288 + $0xa0] sm:$0xff] %v2611
        %2644 = vst [vmem:[%s288 + $0xa8] sm:$0xff] %v2612
        %2645 = vst [vmem:[%s288 + $0xb0] sm:$0xff] %v2613
        %2646 = vst [vmem:[%s288 + $0xb8] sm:$0xff] %v2614
        %2647 = vst [vmem:[%s288 + $0xc0] sm:$0xff] %v2615
        %2648 = vst [vmem:[%s288 + $0xc8] sm:$0xff] %v2616
        %2649 = vst [vmem:[%s288 + $0xd0] sm:$0xff] %v2617
        %2650 = vst [vmem:[%s288 + $0xd8] sm:$0xff] %v2618
        %2651 = vst [vmem:[%s288 + $0xe0] sm:$0xff] %v2619
        %2652 = vst [vmem:[%s288 + $0xe8] sm:$0xff] %v2620
        %2653 = vst [vmem:[%s288 + $0xf0] sm:$0xff] %v2621
        %2654 = vst [vmem:[%s288 + $0xf8] sm:$0xff] %v2622
        %s2655 = sand.u32 %s186, 1
        %s2656 = scalar_lea.sflag [#allocation3], %s2655
        %s2657 = sand.u32 %s186, 1
        %s2658 = smul.addr %s2657, 256
        %s2659 = scalar_lea.vmem [#allocation2], %s2658
        // Predicated region
        $region49: #{tpu_custom_call.1} parent=47 // pred_check
          %p2660 = pneg %p196
        $region50: #{tpu_custom_call.1} parent=47 // pred_check_branch
          %2662 = sbr.rel (%p2660) target = $region52
        $region51: #{tpu_custom_call.1} parent=47 // pred_region
          %s2663 = smul.u32 32, %s21
          %s2665 = ssub.s32 4096, 4096
          %2666 = vsyncadd %s2656, %s2665
          %s2667 = smul.addr %s2663, 128
          %s2668 = scalar_lea.hbm %s7, %s2667
          %s2669 = sshll.u32 %s2659, 4
          %s2670 = int_to_ptr.vmem [resolvable:$true] %s2669
          %2675 = dma.vmem_to_hbm [thread:$0]  %s2670, 4096, %s2668, %s2656, 128, 128, 8
        $region52: #{tpu_custom_call.1} parent=47 // pred_fallthru
          _
      $region48: #{tpu_custom_call.1} parent=5 // pred_fallthru
        _
      %p2676 = scmp.le.s32.totalorder 2, %s16
      // Predicated region
      $region53: #{tpu_custom_call.1} parent=5 // pred_check
        %p2677 = pneg %p2676
      $region54: #{tpu_custom_call.1} parent=5 // pred_check_branch
        %2679 = sbr.rel (%p2677) target = $region56
      $region55: #{tpu_custom_call.1} parent=5 // pred_region
        %s2680 = ssub.s32 %s16, 2
        // Predicated region
        $region57: #{tpu_custom_call.1} parent=55 // pred_check
          %p2681 = pneg %p202
        $region58: #{tpu_custom_call.1} parent=55 // pred_check_branch
          %2683 = sbr.rel (%p2681) target = $region60
        $region59: #{tpu_custom_call.1} parent=55 // pred_region
          %s2684 = sand.u32 %s187, 1
          %s2685 = scalar_lea.sflag [#allocation3], %s2684
          %s2686 = sand.u32 %s187, 1
          %s2687 = smul.addr %s2686, 256
          %s2688 = scalar_lea.vmem [#allocation2], %s2687
          %2689 = dma.done %s2685, 4096
        $region60: #{tpu_custom_call.1} parent=55 // pred_fallthru
          _
      $region56: #{tpu_custom_call.1} parent=5 // pred_fallthru
        _
    $region6: #{tpu_custom_call.1} parent=1 // loop_footer
      %s20 = sadd.s32 1, %s16
    $region7: #{tpu_custom_call.1} parent=1 // loop_footer_branch
      %15 = sbr.rel target = $region3
    $region8: #{tpu_custom_call.1} parent=1 // loop_exit
      _
    %2690 = vsyncpa [#allocation3], 1
    %s2691 = scalar_lea.sflag [#allocation3], 1
    %2692 = vsyncpa %s2691, 1

</llo_original>
